<compile_context>
chip_gen: v7x
topology: tpu7x:2x2x1
jax: 0.10.0
libtpu: 0.0.40
codegen_flags: <defaults>
</compile_context>

<pallas_src>
import functools
import math

import jax
import jax.numpy as jnp
from jax.experimental import pallas as pl
from jax.experimental.pallas import tpu as pltpu


# ---------------------------------------------------------------------------
# Model structure (mirrors the PyTorch Decoder)
# ---------------------------------------------------------------------------
def layer_sizes(num, latent_dim):
    sizes = [latent_dim * 2 ** i for i in range(num)]
    sizes.reverse()
    return sizes


def decoder_dims(hidden_n, latent_dim, embed_dim):
    """Per-layer (in_dim, out_dim) list matching the PyTorch Decoder."""
    hidden_dims = layer_sizes(hidden_n, latent_dim)
    hidden_dims.reverse()  # -> [latent, 2*latent, ..., latent*2**(hidden_n-1)]
    dims = [(latent_dim, hidden_dims[0])]            # 'input' (no activation)
    for i in range(len(hidden_dims)):                # 'hidden_i' (+ LeakyReLU(0.2))
        dim = hidden_dims[i]
        next_dim = hidden_dims[i + 1] if i + 1 <= len(hidden_dims) - 1 else dim
        dims.append((dim, next_dim))
    dims.append((hidden_dims[-1], embed_dim))        # 'out' (no activation)
    return dims


# ---------------------------------------------------------------------------
# Small static helpers (all evaluated at trace time)
# ---------------------------------------------------------------------------
def _nbytes(shape, dtype):
    return int(math.prod(shape)) * jnp.dtype(dtype).itemsize


def _vmem_usable_bytes():
    """Per-core VMEM we are willing to ask Mosaic for (never the full physical)."""
    cap = 64 << 20                                   # conservative fallback (v7x per-core)
    try:
        cap = int(pltpu.get_tpu_info().vmem_capacity_bytes)
    except Exception:
        pass
    # ~109 MiB on v5e/v6e (128 MiB physical), ~54 MiB on v7x (64 MiB physical).
    return int(cap * 0.85)


def _pick_tile_b(batch, target):
    """Largest tile <= target that divides batch and keeps (8,*) sublane alignment."""
    t = min(target, batch)
    if batch % t == 0 and (t % 8 == 0 or t == batch):
        return t
    for cand in range(t - (t % 8), 7, -8):
        if cand > 0 and batch % cand == 0:
            return cand
    return batch


def _pick_k_tile(k_dim):
    """K-tile for streamed weights: prefer 512, keep >= 2 chunks so the DMA pipelines."""
    for cand in (512, 256, 128, 64, 32, 16, 8):
        if k_dim % cand == 0 and k_dim // cand >= 2:
            return cand
    return k_dim


def _choose_streamed(w_shapes, w_nbytes, tile_b, latent_dim, embed_dim, usable):
    """Greedily keep the smallest weights resident until the per-core budget is full."""
    widest = max(s[1] for s in w_shapes)
    reserve = (2 * tile_b * latent_dim * 2           # double-buffered bf16 input tiles
               + 2 * tile_b * embed_dim * 4          # double-buffered f32 output tiles
               + 4 * tile_b * widest * 4             # f32 activations + bf16 copies
               + (12 << 20))                         # streamed-weight buffers + Mosaic scratch
    allowance = max(0, usable - reserve)
    order = sorted(range(len(w_nbytes)), key=lambda i: w_nbytes[i])
    streamed = [False] * len(w_nbytes)
    total = 0
    for i in order:
        if total + w_nbytes[i] <= allowance:
            total += w_nbytes[i]
        else:
            streamed[i] = True
    return streamed


def _vmem_limit_bytes(weights, streamed, k_tiles, tile_b, latent_dim, embed_dim,
                      in_itemsize, out_itemsize, usable):
    resident = sum(_nbytes(w.shape, w.dtype)
                   for i, w in enumerate(weights) if not streamed[i])
    stream_bufs = sum(2 * k_tiles[i] * weights[i].shape[1]
                      * jnp.dtype(weights[i].dtype).itemsize
                      for i in range(len(weights)) if streamed[i])
    io = 2 * tile_b * latent_dim * in_itemsize + 2 * tile_b * embed_dim * out_itemsize
    widest = max(w.shape[1] for w in weights)
    acts = 4 * tile_b * widest * 4                   # f32 h + casts + slack
    budget = int(1.25 * (resident + stream_bufs + io + acts)) + (4 << 20)
    return max(16 << 20, min(budget, usable))


def _weight_spec(shape):
    """Grid-invariant resident weight block: single-buffered in VMEM."""
    index_map = lambda b: (0, 0)
    if hasattr(pl, "Buffered"):
        try:
            return pl.BlockSpec(shape, index_map, pipeline_mode=pl.Buffered(1))
        except TypeError:                            # older BlockSpec signature
            pass
    return pl.BlockSpec(shape, index_map)


# ---------------------------------------------------------------------------
# Kernel
# ---------------------------------------------------------------------------
def _streamed_matmul(h, w_hbm, buf, sem, k_tile):
    """y = h @ W with W streamed HBM->VMEM in double-buffered K tiles, f32 accumulate."""
    k_dim, n_dim = w_hbm.shape
    num_k = k_dim // k_tile
    h = h.astype(buf.dtype)

    def cp(kk, slot):                                # kk is a Python int (static)
        return pltpu.make_async_copy(
            w_hbm.at[pl.ds(kk * k_tile, k_tile)], buf.at[slot], sem.at[slot])

    cp(0, 0).start()
    acc = jnp.zeros((h.shape[0], n_dim), jnp.float32)
    for kk in range(num_k):                          # static unroll
        slot = kk & 1
        if kk + 1 < num_k:                           # prefetch next tile, other slot
            cp(kk + 1, 1 - slot).start()
        cp(kk, slot).wait()
        acc = acc + jnp.dot(h[:, kk * k_tile:(kk + 1) * k_tile], buf[slot],
                            preferred_element_type=jnp.float32)
    return acc


def _make_decoder_kernel(num_layers, streamed, k_tiles):
    streamed = tuple(streamed)

    def kernel(x_ref, *refs):
        w_refs = refs[:num_layers]
        o_ref = refs[num_layers]
        scratch = refs[num_layers + 1:]

        h = x_ref[...]                               # already in the weight compute dtype
        si = 0
        for i, w_ref in enumerate(w_refs):
            if streamed[i]:
                buf, sem = scratch[2 * si], scratch[2 * si + 1]
                si += 1
                h = _streamed_matmul(h, w_ref, buf, sem, k_tiles[i])
            else:
                w = w_ref[...]                       # resident weight tile
                h = jnp.dot(h.astype(w.dtype), w, preferred_element_type=jnp.float32)
            # LeakyReLU(0.2) only after 'hidden_i' layers (not 'input', not 'out').
            if 0 < i < num_layers - 1:
                h = jnp.maximum(h, jnp.float32(0.2) * h)
        o_ref[...] = h.astype(o_ref.dtype)

    return kernel


# ---------------------------------------------------------------------------
# Wrapper
# ---------------------------------------------------------------------------
@functools.partial(jax.jit, static_argnames=("tile_b", "stream_threshold_bytes"))
def decoder_forward(x, weights, *, tile_b=None, stream_threshold_bytes=None):
    """x: [B, latent_dim]; weights: list of [in, out] (bf16 recommended)."""
    B, latent_dim = x.shape
    num_layers = len(weights)
    embed_dim = weights[-1].shape[1]

    usable = _vmem_usable_bytes()
    tile_b = _pick_tile_b(B, 256 if tile_b is None else tile_b)
    assert B % tile_b == 0, (B, tile_b)

    w_shapes = [tuple(w.shape) for w in weights]
    w_nbytes = [_nbytes(w.shape, w.dtype) for w in weights]
    if stream_threshold_bytes is None:
        streamed = _choose_streamed(w_shapes, w_nbytes, tile_b, latent_dim,
                                    embed_dim, usable)
    else:
        streamed = [nb > stream_threshold_bytes for nb in w_nbytes]
    k_tiles = {i: _pick_k_tile(w_shapes[i][0])
               for i in range(num_layers) if streamed[i]}

    # Cast activations to the weight compute dtype once, outside the kernel
    # (halves the input-tile DMA; the dot consumed this dtype anyway).
    x_in = x.astype(weights[0].dtype) if weights[0].dtype != x.dtype else x

    kernel = _make_decoder_kernel(num_layers, streamed, k_tiles)

    in_specs = [pl.BlockSpec((tile_b, latent_dim), lambda b: (b, 0))]
    scratch_shapes = []
    for i, w in enumerate(weights):
        if streamed[i]:
            in_specs.append(pl.BlockSpec(memory_space=pl.ANY))      # raw HBM ref
            scratch_shapes.append(pltpu.VMEM((2, k_tiles[i], w_shapes[i][1]), w.dtype))
            scratch_shapes.append(pltpu.SemaphoreType.DMA((2,)))
        else:
            in_specs.append(_weight_spec(w_shapes[i]))

    out_spec = pl.BlockSpec((tile_b, embed_dim), lambda b: (b, 0))

    grid_steps = B // tile_b
    flops = 2 * B * sum(din * dout for din, dout in w_shapes)
    bytes_accessed = (_nbytes(x_in.shape, x_in.dtype)
                      + B * embed_dim * jnp.dtype(x.dtype).itemsize
                      + sum(nb * (grid_steps if streamed[i] else 1)
                            for i, nb in enumerate(w_nbytes)))
    vmem_limit = _vmem_limit_bytes(weights, streamed, k_tiles, tile_b, latent_dim,
                                   embed_dim, jnp.dtype(x_in.dtype).itemsize,
                                   jnp.dtype(x.dtype).itemsize, usable)

    return pl.pallas_call(
        kernel,
        out_shape=jax.ShapeDtypeStruct((B, embed_dim), x.dtype),
        grid=(grid_steps,),
        in_specs=in_specs,
        out_specs=out_spec,
        scratch_shapes=scratch_shapes,
        compiler_params=pltpu.CompilerParams(
            dimension_semantics=("parallel",),
            vmem_limit_bytes=vmem_limit,
        ),
        cost_estimate=pl.CostEstimate(
            flops=int(flops), transcendentals=0, bytes_accessed=int(bytes_accessed)),
    )(x_in, *weights)


# ---------------------------------------------------------------------------
# Init + references + test
# ---------------------------------------------------------------------------
def init_weights(hidden_n, latent_dim, embed_dim, key):
    dims = decoder_dims(hidden_n, latent_dim, embed_dim)
    weights = []
    for (din, dout) in dims:
        key, sub = jax.random.split(key)
        w = jax.random.normal(sub, (din, dout), dtype=jnp.float32) * (1.0 / jnp.sqrt(din))
        weights.append(w)
    return weights


def reference_forward(x, weights):
    """Pure-JAX reference. With f32 weights this is the exact PyTorch semantics;
    with bf16 weights it mirrors the kernel's precision (bf16 dot inputs, f32 acc)."""
    num_layers = len(weights)
    h = x.astype(jnp.float32)
    for i, w in enumerate(weights):
        h = jnp.dot(h.astype(w.dtype), w, preferred_element_type=jnp.float32)
        if 0 < i < num_layers - 1:
            h = jnp.maximum(h, 0.2 * h)
    return h


if __name__ == "__main__":
    # Small shapes consistent with the module's structure.
    HIDDEN_N = 4
    LATENT_DIM = 32     # scaled-down analogue of 512
    EMBED_DIM = 128     # scaled-down analogue of 768; multiple of 128 -> lane-dense stores
    BATCH = 512         # 2 grid steps at the default tile_b=256

    key = jax.random.PRNGKey(0)
    key, kx = jax.random.split(key)
    x = jax.random.normal(kx, (BATCH, LATENT_DIM), dtype=jnp.float32)

    weights_f32 = init_weights(HIDDEN_N, LATENT_DIM, EMBED_DIM, key)
    weights = [w.astype(jnp.bfloat16) for w in weights_f32]   # bf16 feeds the MXU natively

    # 1) fully-resident path (auto VMEM budgeting keeps everything resident here)
    out = jax.block_until_ready(decoder_forward(x, weights))
    # 2) force the larger weights through the streamed HBM->VMEM K-tile pipeline
    #    so that code path (used at production scale on v7x) is exercised too.
    out_stream = jax.block_until_ready(
        decoder_forward(x, weights, stream_threshold_bytes=48 * 1024))

    ref_mixed = reference_forward(x, weights)        # mirrors kernel precision
    ref_f32 = reference_forward(x, weights_f32)      # true f32 module semantics

    assert out.shape == (BATCH, EMBED_DIM), out.shape
    assert bool(jnp.all(jnp.isfinite(out)))
    assert bool(jnp.allclose(out, ref_mixed, rtol=1e-2, atol=1e-2)), \
        float(jnp.max(jnp.abs(out - ref_mixed)))
    assert bool(jnp.allclose(out_stream, ref_mixed, rtol=1e-2, atol=1e-2)), \
        float(jnp.max(jnp.abs(out_stream - ref_mixed)))
    rel = float(jnp.linalg.norm(out - ref_f32) / (jnp.linalg.norm(ref_f32) + 1e-12))
    assert rel < 5e-2, rel                            # bf16-weight error vs f32 module

    print("KERNEL_OK")
</pallas_src>

<mosaic_0001>
module attributes {stable_mosaic.version = 11 : i64} {
  func.func @kernel(%arg0: i32, %arg1: memref<256x32xbf16, #tpu.memory_space<vmem>>, %arg2: memref<32x32xbf16, #tpu.memory_space<vmem>>, %arg3: memref<32x64xbf16, #tpu.memory_space<vmem>>, %arg4: memref<64x128xbf16, #tpu.memory_space<vmem>>, %arg5: memref<128x256xbf16, #tpu.memory_space<vmem>>, %arg6: memref<256x256xbf16, #tpu.memory_space<vmem>>, %arg7: memref<256x128xbf16, #tpu.memory_space<vmem>>, %arg8: memref<256x128xf32, #tpu.memory_space<vmem>>) attributes {dimension_semantics = [#tpu.dimension_semantics<parallel>], iteration_bounds = array<i64: 2>, scalar_prefetch = 0 : i64, scratch_operands = 0 : i64, tpu.core_type = #tpu.core_type<tc>, window_params = [{transform_indices = @transform_0, window_bounds = array<i64: 256, 32>}, {pipeline_mode = #tpu.pipeline_mode<synchronous>, transform_indices = @transform_1, window_bounds = array<i64: 32, 32>}, {pipeline_mode = #tpu.pipeline_mode<synchronous>, transform_indices = @transform_2, window_bounds = array<i64: 32, 64>}, {pipeline_mode = #tpu.pipeline_mode<synchronous>, transform_indices = @transform_3, window_bounds = array<i64: 64, 128>}, {pipeline_mode = #tpu.pipeline_mode<synchronous>, transform_indices = @transform_4, window_bounds = array<i64: 128, 256>}, {pipeline_mode = #tpu.pipeline_mode<synchronous>, transform_indices = @transform_5, window_bounds = array<i64: 256, 256>}, {pipeline_mode = #tpu.pipeline_mode<synchronous>, transform_indices = @transform_6, window_bounds = array<i64: 256, 128>}, {transform_indices = @transform_7, window_bounds = array<i64: 256, 128>}]} {
    %c0 = arith.constant 0 : index
    %c0_0 = arith.constant 0 : index
    %0 = vector.load %arg1[%c0, %c0_0] : memref<256x32xbf16, #tpu.memory_space<vmem>>, vector<256x32xbf16>
    %c0_1 = arith.constant 0 : index
    %c0_2 = arith.constant 0 : index
    %1 = vector.load %arg2[%c0_1, %c0_2] : memref<32x32xbf16, #tpu.memory_space<vmem>>, vector<32x32xbf16>
    %cst = arith.constant dense<0.000000e+00> : vector<256x32xf32>
    %2 = tpu.matmul %0, %1, %cst {dimension_numbers = #tpu.dot_dimension_numbers<[1], [0], [0], [1], [0, 0, 1, 1], [], []>} : vector<256x32xbf16>, vector<32x32xbf16>, vector<256x32xf32> -> vector<256x32xf32>
    %c0_3 = arith.constant 0 : index
    %c0_4 = arith.constant 0 : index
    %3 = vector.load %arg3[%c0_3, %c0_4] : memref<32x64xbf16, #tpu.memory_space<vmem>>, vector<32x64xbf16>
    %4 = arith.truncf %2 : vector<256x32xf32> to vector<256x32xbf16>
    %cst_5 = arith.constant dense<0.000000e+00> : vector<256x64xf32>
    %5 = tpu.matmul %4, %3, %cst_5 {dimension_numbers = #tpu.dot_dimension_numbers<[1], [0], [0], [1], [0, 0, 1, 1], [], []>} : vector<256x32xbf16>, vector<32x64xbf16>, vector<256x64xf32> -> vector<256x64xf32>
    %cst_6 = arith.constant 2.000000e-01 : f32
    %6 = vector.broadcast %cst_6 : f32 to vector<256x64xf32>
    %7 = arith.mulf %6, %5 : vector<256x64xf32>
    %8 = arith.maximumf %5, %7 : vector<256x64xf32>
    %c0_7 = arith.constant 0 : index
    %c0_8 = arith.constant 0 : index
    %9 = vector.load %arg4[%c0_7, %c0_8] : memref<64x128xbf16, #tpu.memory_space<vmem>>, vector<64x128xbf16>
    %10 = arith.truncf %8 : vector<256x64xf32> to vector<256x64xbf16>
    %cst_9 = arith.constant dense<0.000000e+00> : vector<256x128xf32>
    %11 = tpu.matmul %10, %9, %cst_9 {dimension_numbers = #tpu.dot_dimension_numbers<[1], [0], [0], [1], [0, 0, 1, 1], [], []>} : vector<256x64xbf16>, vector<64x128xbf16>, vector<256x128xf32> -> vector<256x128xf32>
    %cst_10 = arith.constant 2.000000e-01 : f32
    %12 = vector.broadcast %cst_10 : f32 to vector<256x128xf32>
    %13 = arith.mulf %12, %11 : vector<256x128xf32>
    %14 = arith.maximumf %11, %13 : vector<256x128xf32>
    %c0_11 = arith.constant 0 : index
    %c0_12 = arith.constant 0 : index
    %15 = vector.load %arg5[%c0_11, %c0_12] : memref<128x256xbf16, #tpu.memory_space<vmem>>, vector<128x256xbf16>
    %16 = arith.truncf %14 : vector<256x128xf32> to vector<256x128xbf16>
    %cst_13 = arith.constant dense<0.000000e+00> : vector<256x256xf32>
    %17 = tpu.matmul %16, %15, %cst_13 {dimension_numbers = #tpu.dot_dimension_numbers<[1], [0], [0], [1], [0, 0, 1, 1], [], []>} : vector<256x128xbf16>, vector<128x256xbf16>, vector<256x256xf32> -> vector<256x256xf32>
    %cst_14 = arith.constant 2.000000e-01 : f32
    %18 = vector.broadcast %cst_14 : f32 to vector<256x256xf32>
    %19 = arith.mulf %18, %17 : vector<256x256xf32>
    %20 = arith.maximumf %17, %19 : vector<256x256xf32>
    %c0_15 = arith.constant 0 : index
    %c0_16 = arith.constant 0 : index
    %21 = vector.load %arg6[%c0_15, %c0_16] : memref<256x256xbf16, #tpu.memory_space<vmem>>, vector<256x256xbf16>
    %22 = arith.truncf %20 : vector<256x256xf32> to vector<256x256xbf16>
    %cst_17 = arith.constant dense<0.000000e+00> : vector<256x256xf32>
    %23 = tpu.matmul %22, %21, %cst_17 {dimension_numbers = #tpu.dot_dimension_numbers<[1], [0], [0], [1], [0, 0, 1, 1], [], []>} : vector<256x256xbf16>, vector<256x256xbf16>, vector<256x256xf32> -> vector<256x256xf32>
    %cst_18 = arith.constant 2.000000e-01 : f32
    %24 = vector.broadcast %cst_18 : f32 to vector<256x256xf32>
    %25 = arith.mulf %24, %23 : vector<256x256xf32>
    %26 = arith.maximumf %23, %25 : vector<256x256xf32>
    %c0_19 = arith.constant 0 : index
    %c0_20 = arith.constant 0 : index
    %27 = vector.load %arg7[%c0_19, %c0_20] : memref<256x128xbf16, #tpu.memory_space<vmem>>, vector<256x128xbf16>
    %28 = arith.truncf %26 : vector<256x256xf32> to vector<256x256xbf16>
    %cst_21 = arith.constant dense<0.000000e+00> : vector<256x128xf32>
    %29 = tpu.matmul %28, %27, %cst_21 {dimension_numbers = #tpu.dot_dimension_numbers<[1], [0], [0], [1], [0, 0, 1, 1], [], []>} : vector<256x256xbf16>, vector<256x128xbf16>, vector<256x128xf32> -> vector<256x128xf32>
    %c0_22 = arith.constant 0 : index
    %c0_23 = arith.constant 0 : index
    %30 = vector.load %arg8[%c0_22, %c0_23] : memref<256x128xf32, #tpu.memory_space<vmem>>, vector<256x128xf32>
    tpu.vector_store %arg8[%c0_22, %c0_23], %29 {strides = array<i32>} : memref<256x128xf32, #tpu.memory_space<vmem>>, vector<256x128xf32>,
    return
  }
  func.func @transform_0(%arg0: i32) -> (i32, i32) {
    %c0_i32 = arith.constant 0 : i32
    %c0_i32_0 = arith.constant 0 : i32
    return %arg0, %c0_i32 : i32, i32
  }
  func.func @transform_1(%arg0: i32) -> (i32, i32) {
    %c0_i32 = arith.constant 0 : i32
    %c0_i32_0 = arith.constant 0 : i32
    %c0_i32_1 = arith.constant 0 : i32
    return %c0_i32, %c0_i32_0 : i32, i32
  }
  func.func @transform_2(%arg0: i32) -> (i32, i32) {
    %c0_i32 = arith.constant 0 : i32
    %c0_i32_0 = arith.constant 0 : i32
    %c0_i32_1 = arith.constant 0 : i32
    return %c0_i32, %c0_i32_0 : i32, i32
  }
  func.func @transform_3(%arg0: i32) -> (i32, i32) {
    %c0_i32 = arith.constant 0 : i32
    %c0_i32_0 = arith.constant 0 : i32
    %c0_i32_1 = arith.constant 0 : i32
    return %c0_i32, %c0_i32_0 : i32, i32
  }
  func.func @transform_4(%arg0: i32) -> (i32, i32) {
    %c0_i32 = arith.constant 0 : i32
    %c0_i32_0 = arith.constant 0 : i32
    %c0_i32_1 = arith.constant 0 : i32
    return %c0_i32, %c0_i32_0 : i32, i32
  }
  func.func @transform_5(%arg0: i32) -> (i32, i32) {
    %c0_i32 = arith.constant 0 : i32
    %c0_i32_0 = arith.constant 0 : i32
    %c0_i32_1 = arith.constant 0 : i32
    return %c0_i32, %c0_i32_0 : i32, i32
  }
  func.func @transform_6(%arg0: i32) -> (i32, i32) {
    %c0_i32 = arith.constant 0 : i32
    %c0_i32_0 = arith.constant 0 : i32
    %c0_i32_1 = arith.constant 0 : i32
    return %c0_i32, %c0_i32_0 : i32, i32
  }
  func.func @transform_7(%arg0: i32) -> (i32, i32) {
    %c0_i32 = arith.constant 0 : i32
    %c0_i32_0 = arith.constant 0 : i32
    return %arg0, %c0_i32 : i32, i32
  }
}

</mosaic_0001>

<llo_original>
// kernel: decoder_forward.1
$region0: #{decoder_forward.1}
  #allocation0 [shape = 'u32[]', space=smem, size = 0x4, offset = 0x4, fixed_abs, tag = 'smem constant byte address 0x4 - core index']
  #allocation1 [shape = 'u32[144,128]{1,0:T(1,128)}', space=vmem, size = 0x12000, scoped, tag = 'internal scratch']
  %s0 = inlined_call_operand.vmem [shape: bf16[512,32], index: 0, kind: input, shape index: {}]
  %s1 = inlined_call_operand.hbm [shape: bf16[32,32], index: 1, kind: input, shape index: {}]
  %s2 = inlined_call_operand.hbm [shape: bf16[32,64], index: 2, kind: input, shape index: {}]
  %s3 = inlined_call_operand.hbm [shape: bf16[64,128], index: 3, kind: input, shape index: {}]
  %s4 = inlined_call_operand.vmem [shape: bf16[128,256], index: 4, kind: input, shape index: {}]
  %s5 = inlined_call_operand.vmem [shape: bf16[256,256], index: 5, kind: input, shape index: {}]
  %s6 = inlined_call_operand.vmem [shape: bf16[256,128], index: 6, kind: input, shape index: {}]
  %s7 = inlined_call_operand.hbm [shape: f32[512,128], index: 7, kind: output, shape index: {}]
  %s8 = sld [smem:[#allocation0]]
  $region73: #{decoder_forward.1} parent=0
    _
  %s10 = ssub.s32 1, %s8
  %s11 = scalar_select 0, %s10, %s8
  $region1: #{decoder_forward.1} parent=0
    #allocation2 [shape = 'u8[8192]{0}', space=vmem, size = 0x2000, scoped, tag = 'input window, operand 1, single buffered']
    #allocation3 [shape = 's32[2]{0}', space=sflag, size = 0x8, scoped, tag = 'scoped memory for decoder_forward.1']
    #allocation4 [shape = 's32[2]{0}', space=sflag, size = 0x8, scoped, tag = 'scoped memory for decoder_forward.1']
    #allocation5 [shape = 'u8[8192]{0}', space=vmem, size = 0x2000, scoped, tag = 'input window, operand 2, single buffered']
    #allocation6 [shape = 's32[1]{0}', space=sflag, size = 0x4, scoped, tag = 'scoped memory for decoder_forward.1']
    #allocation7 [shape = 'u8[16384]{0}', space=vmem, size = 0x4000, scoped, tag = 'input window, operand 3, single buffered']
    #allocation8 [shape = 'u8[262144]{0}', space=vmem, size = 0x40000, scoped, tag = 'output window, operand 0']
    %12 = vsyncpa [#allocation3], 0
    %13 = vsyncpa [#allocation6], 0
    %14 = vsyncpa [#allocation4], 0
    %s15 = scalar_lea.sflag [#allocation4], 1
    %16 = vsyncpa %s15, 0
    loop: start=0, step=1, limit=4
    $region2: #{decoder_forward.1} parent=1 // loop_pre_header
      _
    $region3: #{decoder_forward.1} parent=1 // loop_header
      %s18 = sphi 0, %s22
      %p19 = scmp.ge.s32.totalorder %s18, 4
      %s28 = sphi 0, %s30
      %s31 = sphi 0, %s28
      %s32 = sphi 0, %s31
      %s48 = sphi 0, %s32
      %s52 = sphi 0, %s52
      %s54 = sphi 0, %s52
      %s55 = sphi 0, %s54
      %s69 = sphi 0, %s55
      %s73 = sphi 0, %s73
      %s75 = sphi 0, %s73
      %s76 = sphi 0, %s75
      %s90 = sphi 0, %s76
      %s94 = sphi 0, %s94
      %s96 = sphi 0, %s94
      %s97 = sphi 0, %s96
      %s111 = sphi 0, %s97
      %s115 = sphi 0, %s115
      %s117 = sphi 0, %s115
      %s118 = sphi 0, %s117
      %s132 = sphi 0, %s118
      %s136 = sphi 0, %s136
      %s138 = sphi 0, %s136
      %s139 = sphi 0, %s138
      %s153 = sphi 0, %s139
      %s157 = sphi 0, %s157
      %s159 = sphi 0, %s157
      %s160 = sphi 0, %s159
      %s174 = sphi 0, %s160
      %s180 = sphi 0, %s182
      %s183 = sphi 0, %s180
      %s184 = sphi 0, %s183
      %s200 = sphi 0, %s184
    $region4: #{decoder_forward.1} parent=1 // loop_header_branch
      %21 = sbr.rel (%p19) target = $region8
    $region5: #{decoder_forward.1} parent=1 // loop_body
      %s23 = ssub.s32 %s18, 1
      %s24 = ssub.s32 %s18, 2
      %s25 = sadd.s32 %s18, 1
      %s26 = ssub.s32 %s18, %s25
      %p27 = scmp.eq.s32.totalorder %s26, 0
      %s29 = sadd.s32 %s28, 1
      %s30 = scalar_select %p27, %s28, %s29
      %p33 = pneg %p27
      %p34 = scmp.eq.s32.totalorder %s18, 1
      %p35 = por %p33, %p34
      %p36 = scmp.ne.s32.totalorder %s28, %s31
      %p37 = scmp.eq.s32.totalorder %s18, 0
      %p38 = por %p36, %p37
      %p39 = scmp.ne.s32.totalorder %s28, %s31
      %p40 = scmp.eq.s32.totalorder %s23, 1
      %p41 = por %p39, %p40
      %p42 = scmp.ne.s32.totalorder %s31, %s32
      %p43 = scmp.eq.s32.totalorder %s23, 0
      %p44 = por %p42, %p43
      %p45 = scmp.ne.s32.totalorder %s31, %s32
      %p46 = scmp.eq.s32.totalorder %s24, 1
      %p47 = por %p45, %p46
      %p49 = scmp.ne.s32.totalorder %s32, %s48
      %p50 = scmp.eq.s32.totalorder %s24, 0
      %p51 = por %p49, %p50
      %s53 = sadd.s32 %s52, 1
      %p56 = scmp.eq.s32.totalorder %s18, 1
      %p57 = scmp.ne.s32.totalorder %s52, %s54
      %p58 = scmp.eq.s32.totalorder %s18, 0
      %p59 = por %p57, %p58
      %p60 = scmp.ne.s32.totalorder %s52, %s54
      %p61 = scmp.eq.s32.totalorder %s23, 1
      %p62 = por %p60, %p61
      %p63 = scmp.ne.s32.totalorder %s54, %s55
      %p64 = scmp.eq.s32.totalorder %s23, 0
      %p65 = por %p63, %p64
      %p66 = scmp.ne.s32.totalorder %s54, %s55
      %p67 = scmp.eq.s32.totalorder %s24, 1
      %p68 = por %p66, %p67
      %p70 = scmp.ne.s32.totalorder %s55, %s69
      %p71 = scmp.eq.s32.totalorder %s24, 0
      %p72 = por %p70, %p71
      %s74 = sadd.s32 %s73, 1
      %p77 = scmp.eq.s32.totalorder %s18, 1
      %p78 = scmp.ne.s32.totalorder %s73, %s75
      %p79 = scmp.eq.s32.totalorder %s18, 0
      %p80 = por %p78, %p79
      %p81 = scmp.ne.s32.totalorder %s73, %s75
      %p82 = scmp.eq.s32.totalorder %s23, 1
      %p83 = por %p81, %p82
      %p84 = scmp.ne.s32.totalorder %s75, %s76
      %p85 = scmp.eq.s32.totalorder %s23, 0
      %p86 = por %p84, %p85
      %p87 = scmp.ne.s32.totalorder %s75, %s76
      %p88 = scmp.eq.s32.totalorder %s24, 1
      %p89 = por %p87, %p88
      %p91 = scmp.ne.s32.totalorder %s76, %s90
      %p92 = scmp.eq.s32.totalorder %s24, 0
      %p93 = por %p91, %p92
      %s95 = sadd.s32 %s94, 1
      %p98 = scmp.eq.s32.totalorder %s18, 1
      %p99 = scmp.ne.s32.totalorder %s94, %s96
      %p100 = scmp.eq.s32.totalorder %s18, 0
      %p101 = por %p99, %p100
      %p102 = scmp.ne.s32.totalorder %s94, %s96
      %p103 = scmp.eq.s32.totalorder %s23, 1
      %p104 = por %p102, %p103
      %p105 = scmp.ne.s32.totalorder %s96, %s97
      %p106 = scmp.eq.s32.totalorder %s23, 0
      %p107 = por %p105, %p106
      %p108 = scmp.ne.s32.totalorder %s96, %s97
      %p109 = scmp.eq.s32.totalorder %s24, 1
      %p110 = por %p108, %p109
      %p112 = scmp.ne.s32.totalorder %s97, %s111
      %p113 = scmp.eq.s32.totalorder %s24, 0
      %p114 = por %p112, %p113
      %s116 = sadd.s32 %s115, 1
      %p119 = scmp.eq.s32.totalorder %s18, 1
      %p120 = scmp.ne.s32.totalorder %s115, %s117
      %p121 = scmp.eq.s32.totalorder %s18, 0
      %p122 = por %p120, %p121
      %p123 = scmp.ne.s32.totalorder %s115, %s117
      %p124 = scmp.eq.s32.totalorder %s23, 1
      %p125 = por %p123, %p124
      %p126 = scmp.ne.s32.totalorder %s117, %s118
      %p127 = scmp.eq.s32.totalorder %s23, 0
      %p128 = por %p126, %p127
      %p129 = scmp.ne.s32.totalorder %s117, %s118
      %p130 = scmp.eq.s32.totalorder %s24, 1
      %p131 = por %p129, %p130
      %p133 = scmp.ne.s32.totalorder %s118, %s132
      %p134 = scmp.eq.s32.totalorder %s24, 0
      %p135 = por %p133, %p134
      %s137 = sadd.s32 %s136, 1
      %p140 = scmp.eq.s32.totalorder %s18, 1
      %p141 = scmp.ne.s32.totalorder %s136, %s138
      %p142 = scmp.eq.s32.totalorder %s18, 0
      %p143 = por %p141, %p142
      %p144 = scmp.ne.s32.totalorder %s136, %s138
      %p145 = scmp.eq.s32.totalorder %s23, 1
      %p146 = por %p144, %p145
      %p147 = scmp.ne.s32.totalorder %s138, %s139
      %p148 = scmp.eq.s32.totalorder %s23, 0
      %p149 = por %p147, %p148
      %p150 = scmp.ne.s32.totalorder %s138, %s139
      %p151 = scmp.eq.s32.totalorder %s24, 1
      %p152 = por %p150, %p151
      %p154 = scmp.ne.s32.totalorder %s139, %s153
      %p155 = scmp.eq.s32.totalorder %s24, 0
      %p156 = por %p154, %p155
      %s158 = sadd.s32 %s157, 1
      %p161 = scmp.eq.s32.totalorder %s18, 1
      %p162 = scmp.ne.s32.totalorder %s157, %s159
      %p163 = scmp.eq.s32.totalorder %s18, 0
      %p164 = por %p162, %p163
      %p165 = scmp.ne.s32.totalorder %s157, %s159
      %p166 = scmp.eq.s32.totalorder %s23, 1
      %p167 = por %p165, %p166
      %p168 = scmp.ne.s32.totalorder %s159, %s160
      %p169 = scmp.eq.s32.totalorder %s23, 0
      %p170 = por %p168, %p169
      %p171 = scmp.ne.s32.totalorder %s159, %s160
      %p172 = scmp.eq.s32.totalorder %s24, 1
      %p173 = por %p171, %p172
      %p175 = scmp.ne.s32.totalorder %s160, %s174
      %p176 = scmp.eq.s32.totalorder %s24, 0
      %p177 = por %p175, %p176
      %s178 = ssub.s32 %s18, %s25
      %p179 = scmp.eq.s32.totalorder %s178, 0
      %s181 = sadd.s32 %s180, 1
      %s182 = scalar_select %p179, %s180, %s181
      %p185 = pneg %p179
      %p186 = scmp.eq.s32.totalorder %s18, 1
      %p187 = por %p185, %p186
      %p188 = scmp.ne.s32.totalorder %s180, %s183
      %p189 = scmp.eq.s32.totalorder %s18, 0
      %p190 = por %p188, %p189
      %p191 = scmp.ne.s32.totalorder %s180, %s183
      %p192 = scmp.eq.s32.totalorder %s23, 1
      %p193 = por %p191, %p192
      %p194 = scmp.ne.s32.totalorder %s183, %s184
      %p195 = scmp.eq.s32.totalorder %s23, 0
      %p196 = por %p194, %p195
      %p197 = scmp.ne.s32.totalorder %s183, %s184
      %p198 = scmp.eq.s32.totalorder %s24, 1
      %p199 = por %p197, %p198
      %p201 = scmp.ne.s32.totalorder %s184, %s200
      %p202 = scmp.eq.s32.totalorder %s24, 0
      %p203 = por %p201, %p202
      %p204 = scmp.le.s32.totalorder 1, %s18
      %p205 = scmp.lt.s32.totalorder %s18, 3
      %p206 = pnand %p204, %p205
      %p207 = pneg %p206
      // Predicated region
      $region9: #{decoder_forward.1} parent=5 // pred_check
        _
      $region10: #{decoder_forward.1} parent=5 // pred_check_branch
        %209 = sbr.rel (%p206) target = $region12
      $region11: #{decoder_forward.1} parent=5 // pred_region
        %s210 = ssub.s32 %s18, 1
        // Predicated region
        $region13: #{decoder_forward.1} parent=11 // pred_check
          %p211 = pneg %p65
        $region14: #{decoder_forward.1} parent=11 // pred_check_branch
          %213 = sbr.rel (%p211) target = $region16
        $region15: #{decoder_forward.1} parent=11 // pred_region
          %s215 = ssub.s32 256, 256
          %216 = vsyncadd [#allocation3], %s215
          %s217 = sshll.u32 [#allocation2], 4
          %s218 = int_to_ptr.vmem [resolvable:$true] %s217
          %223 = dma.hbm_to_vmem [thread:$0]  %s1, 256, %s218, [#allocation3], 64, 64, 4
        $region16: #{decoder_forward.1} parent=11 // pred_fallthru
          _
        // Predicated region
        $region17: #{decoder_forward.1} parent=11 // pred_check
          %p224 = pneg %p86
        $region18: #{decoder_forward.1} parent=11 // pred_check_branch
          %226 = sbr.rel (%p224) target = $region20
        $region19: #{decoder_forward.1} parent=11 // pred_region
          %s228 = ssub.s32 256, 256
          %229 = vsyncadd [#allocation6], %s228
          %s230 = sshll.u32 [#allocation5], 4
          %s231 = int_to_ptr.vmem [resolvable:$true] %s230
          %236 = dma.hbm_to_vmem [thread:$0]  %s2, 256, %s231, [#allocation6], 64, 64, 4
        $region20: #{decoder_forward.1} parent=11 // pred_fallthru
          _
        // Predicated region
        $region21: #{decoder_forward.1} parent=11 // pred_check
          %p237 = pneg %p107
        $region22: #{decoder_forward.1} parent=11 // pred_check_branch
          %239 = sbr.rel (%p237) target = $region24
        $region23: #{decoder_forward.1} parent=11 // pred_region
          %s241 = ssub.s32 512, 512
          %242 = vsyncadd [#allocation6], %s241
          %s243 = sshll.u32 [#allocation7], 4
          %s244 = int_to_ptr.vmem [resolvable:$true] %s243
          %249 = dma.hbm_to_vmem [thread:$0]  %s3, 512, %s244, [#allocation6], 64, 64, 4
        $region24: #{decoder_forward.1} parent=11 // pred_fallthru
          _
        // Predicated region
        $region25: #{decoder_forward.1} parent=11 // pred_check
          %p250 = pneg %p128
        $region26: #{decoder_forward.1} parent=11 // pred_check_branch
          %252 = sbr.rel (%p250) target = $region28
        $region27: #{decoder_forward.1} parent=11 // pred_region
          _
        $region28: #{decoder_forward.1} parent=11 // pred_fallthru
          _
        // Predicated region
        $region29: #{decoder_forward.1} parent=11 // pred_check
          %p253 = pneg %p149
        $region30: #{decoder_forward.1} parent=11 // pred_check_branch
          %255 = sbr.rel (%p253) target = $region32
        $region31: #{decoder_forward.1} parent=11 // pred_region
          _
        $region32: #{decoder_forward.1} parent=11 // pred_fallthru
          _
        // Predicated region
        $region33: #{decoder_forward.1} parent=11 // pred_check
          %p256 = pneg %p170
        $region34: #{decoder_forward.1} parent=11 // pred_check_branch
          %258 = sbr.rel (%p256) target = $region36
        $region35: #{decoder_forward.1} parent=11 // pred_region
          _
        $region36: #{decoder_forward.1} parent=11 // pred_fallthru
          _
      $region12: #{decoder_forward.1} parent=5 // pred_fallthru
        _
      %p259 = scmp.lt.s32.totalorder %s18, 2
      // Predicated region
      $region37: #{decoder_forward.1} parent=5 // pred_check
        %p260 = pneg %p259
      $region38: #{decoder_forward.1} parent=5 // pred_check_branch
        %262 = sbr.rel (%p260) target = $region40
      $region39: #{decoder_forward.1} parent=5 // pred_region
        // Predicated region
        $region41: #{decoder_forward.1} parent=39 // pred_check
          %p263 = pneg %p38
        $region42: #{decoder_forward.1} parent=39 // pred_check_branch
          %265 = sbr.rel (%p263) target = $region44
        $region43: #{decoder_forward.1} parent=39 // pred_region
          %s266 = smul.u32 32, %s18
          %p267 = scmp.lt.s32.totalorder %s266, 63
          %s268 = scalar_select %p267, %s266, 63
          %s269 = smul.addr %s268, 4
          %s270 = scalar_lea.vmem %s0, %s269
          %s271 = smul.u32 32, %s18
        $region44: #{decoder_forward.1} parent=39 // pred_fallthru
          _
      $region40: #{decoder_forward.1} parent=5 // pred_fallthru
        _
      %p272 = scmp.le.s32.totalorder 1, %s18
      %p273 = scmp.lt.s32.totalorder %s18, 3
      %p274 = pnand %p272, %p273
      %p275 = pneg %p274
      // Predicated region
      $region45: #{decoder_forward.1} parent=5 // pred_check
        _
      $region46: #{decoder_forward.1} parent=5 // pred_check_branch
        %277 = sbr.rel (%p274) target = $region48
      $region47: #{decoder_forward.1} parent=5 // pred_region
        %s278 = ssub.s32 %s18, 1
        // Predicated region
        $region49: #{decoder_forward.1} parent=47 // pred_check
          %p279 = pneg %p65
        $region50: #{decoder_forward.1} parent=47 // pred_check_branch
          %281 = sbr.rel (%p279) target = $region52
        $region51: #{decoder_forward.1} parent=47 // pred_region
          %282 = dma.done [#allocation3], 256
        $region52: #{decoder_forward.1} parent=47 // pred_fallthru
          _
        // Predicated region
        $region53: #{decoder_forward.1} parent=47 // pred_check
          %p283 = pneg %p86
        $region54: #{decoder_forward.1} parent=47 // pred_check_branch
          %285 = sbr.rel (%p283) target = $region56
        $region55: #{decoder_forward.1} parent=47 // pred_region
          %286 = dma.done [#allocation6], 256
        $region56: #{decoder_forward.1} parent=47 // pred_fallthru
          _
        // Predicated region
        $region57: #{decoder_forward.1} parent=47 // pred_check
          %p287 = pneg %p107
        $region58: #{decoder_forward.1} parent=47 // pred_check_branch
          %289 = sbr.rel (%p287) target = $region60
        $region59: #{decoder_forward.1} parent=47 // pred_region
          %290 = dma.done [#allocation6], 512
        $region60: #{decoder_forward.1} parent=47 // pred_fallthru
          _
        %s291 = smul.u32 32, %s23
        %p292 = scmp.lt.s32.totalorder %s291, 63
        %s293 = scalar_select %p292, %s291, 63
        %s294 = smul.addr %s293, 4
        %s295 = scalar_lea.vmem %s0, %s294
        %p296 = pneg %p44
        %p297 = pneg %p41
        %p298 = pneg %p65
        %p299 = pneg %p62
        %p300 = pneg %p86
        %p301 = pneg %p83
        %p302 = pneg %p107
        %p303 = pneg %p104
        %p304 = pneg %p128
        %p305 = pneg %p125
        %p306 = pneg %p149
        %p307 = pneg %p146
        %p308 = pneg %p170
        %p309 = pneg %p167
        %p310 = pneg %p196
        %p311 = pneg %p193
        %s312 = sand.u32 %s183, 1
        %s313 = scalar_lea.sflag [#allocation4], %s312
        %s314 = sand.u32 %s183, 1
        %s315 = smul.addr %s314, 256
        %s316 = scalar_lea.vmem [#allocation8], %s315
        %s317 = smul.u32 32, %s23
        %p318 = scmp.lt.s32.totalorder %s317, 63
        %s319 = scalar_select %p318, %s317, 63
        %s320 = smul.addr %s319, 4
        %s321 = scalar_lea.vmem %s0, %s320
        %s322 = smul.u32 32, %s23
        %s323 = smul.u32 32, %s23
        %v325 = vld [vmem:[%s321] sm:$0xf]
        %v326 = vld [vmem:[%s321 + $0x4] sm:$0xf]
        %v327 = vld [vmem:[%s321 + $0x8] sm:$0xf]
        %v328 = vld [vmem:[%s321 + $0xc] sm:$0xf]
        %v329 = vld [vmem:[%s321 + $0x10] sm:$0xf]
        %v330 = vld [vmem:[%s321 + $0x14] sm:$0xf]
        %v331 = vld [vmem:[%s321 + $0x18] sm:$0xf]
        %v332 = vld [vmem:[%s321 + $0x1c] sm:$0xf]
        %v333 = vld [vmem:[%s321 + $0x20] sm:$0xf]
        %v334 = vld [vmem:[%s321 + $0x24] sm:$0xf]
        %v335 = vld [vmem:[%s321 + $0x28] sm:$0xf]
        %v336 = vld [vmem:[%s321 + $0x2c] sm:$0xf]
        %v337 = vld [vmem:[%s321 + $0x30] sm:$0xf]
        %v338 = vld [vmem:[%s321 + $0x34] sm:$0xf]
        %v339 = vld [vmem:[%s321 + $0x38] sm:$0xf]
        %v340 = vld [vmem:[%s321 + $0x3c] sm:$0xf]
        %v341 = vld [vmem:[%s321 + $0x40] sm:$0xf]
        %v342 = vld [vmem:[%s321 + $0x44] sm:$0xf]
        %v343 = vld [vmem:[%s321 + $0x48] sm:$0xf]
        %v344 = vld [vmem:[%s321 + $0x4c] sm:$0xf]
        %v345 = vld [vmem:[%s321 + $0x50] sm:$0xf]
        %v346 = vld [vmem:[%s321 + $0x54] sm:$0xf]
        %v347 = vld [vmem:[%s321 + $0x58] sm:$0xf]
        %v348 = vld [vmem:[%s321 + $0x5c] sm:$0xf]
        %v349 = vld [vmem:[%s321 + $0x60] sm:$0xf]
        %v350 = vld [vmem:[%s321 + $0x64] sm:$0xf]
        %v351 = vld [vmem:[%s321 + $0x68] sm:$0xf]
        %v352 = vld [vmem:[%s321 + $0x6c] sm:$0xf]
        %v353 = vld [vmem:[%s321 + $0x70] sm:$0xf]
        %v354 = vld [vmem:[%s321 + $0x74] sm:$0xf]
        %v355 = vld [vmem:[%s321 + $0x78] sm:$0xf]
        %v356 = vld [vmem:[%s321 + $0x7c] sm:$0xf]
        %v357 = vld [vmem:[#allocation2] sm:$0xf]
        %v358 = vld [vmem:[#allocation2 + $0x4] sm:$0xf]
        %v359 = vld [vmem:[#allocation2 + $0x8] sm:$0xf]
        %v360 = vld [vmem:[#allocation2 + $0xc] sm:$0xf]
        %v393 = vunpack.c.l.b16 %v325
        %v394 = vunpack.c.l.b16 %v326
        %v395 = vunpack.c.l.b16 %v327
        %v396 = vunpack.c.l.b16 %v328
        %v397 = vunpack.c.l.b16 %v329
        %v398 = vunpack.c.l.b16 %v330
        %v399 = vunpack.c.l.b16 %v331
        %v400 = vunpack.c.l.b16 %v332
        %v401 = vunpack.c.l.b16 %v333
        %v402 = vunpack.c.l.b16 %v334
        %v403 = vunpack.c.l.b16 %v335
        %v404 = vunpack.c.l.b16 %v336
        %v405 = vunpack.c.l.b16 %v337
        %v406 = vunpack.c.l.b16 %v338
        %v407 = vunpack.c.l.b16 %v339
        %v408 = vunpack.c.l.b16 %v340
        %v409 = vunpack.c.l.b16 %v341
        %v410 = vunpack.c.l.b16 %v342
        %v411 = vunpack.c.l.b16 %v343
        %v412 = vunpack.c.l.b16 %v344
        %v413 = vunpack.c.l.b16 %v345
        %v414 = vunpack.c.l.b16 %v346
        %v415 = vunpack.c.l.b16 %v347
        %v416 = vunpack.c.l.b16 %v348
        %v417 = vunpack.c.l.b16 %v349
        %v418 = vunpack.c.l.b16 %v350
        %v419 = vunpack.c.l.b16 %v351
        %v420 = vunpack.c.l.b16 %v352
        %v421 = vunpack.c.l.b16 %v353
        %v422 = vunpack.c.l.b16 %v354
        %v423 = vunpack.c.l.b16 %v355
        %v424 = vunpack.c.l.b16 %v356
        %v425 = vpack.c.b16 %v394, %v393
        %v426 = vpack.c.b16 %v396, %v395
        %v427 = vpack.c.b16 %v398, %v397
        %v428 = vpack.c.b16 %v400, %v399
        %v429 = vpack.c.b16 %v402, %v401
        %v430 = vpack.c.b16 %v404, %v403
        %v431 = vpack.c.b16 %v406, %v405
        %v432 = vpack.c.b16 %v408, %v407
        %v433 = vpack.c.b16 %v410, %v409
        %v434 = vpack.c.b16 %v412, %v411
        %v435 = vpack.c.b16 %v414, %v413
        %v436 = vpack.c.b16 %v416, %v415
        %v437 = vpack.c.b16 %v418, %v417
        %v438 = vpack.c.b16 %v420, %v419
        %v439 = vpack.c.b16 %v422, %v421
        %v440 = vpack.c.b16 %v424, %v423
        %v445 = vunpack.c.l.b16 %v357
        %v446 = vunpack.c.l.b16 %v358
        %v447 = vunpack.c.l.b16 %v359
        %v448 = vunpack.c.l.b16 %v360
        %v449 = vpack.c.b16 %v446, %v445
        %v450 = vpack.c.b16 %v448, %v447
        %vm453 = vcmask 261120
        %v455 = vsel %vm453, %v425, 0
        %v458 = vsel %vm453, %v426, 0
        %v461 = vsel %vm453, %v427, 0
        %v464 = vsel %vm453, %v428, 0
        %v467 = vsel %vm453, %v429, 0
        %v470 = vsel %vm453, %v430, 0
        %v473 = vsel %vm453, %v431, 0
        %v476 = vsel %vm453, %v432, 0
        %v479 = vsel %vm453, %v433, 0
        %v482 = vsel %vm453, %v434, 0
        %v485 = vsel %vm453, %v435, 0
        %v488 = vsel %vm453, %v436, 0
        %v491 = vsel %vm453, %v437, 0
        %v494 = vsel %vm453, %v438, 0
        %v497 = vsel %vm453, %v439, 0
        %v500 = vsel %vm453, %v440, 0
        %502 = vmatprep.subr.bf16.mxu0 0
        %503 = vmatpush1.bf16.msra.mxu0 %v449
        %504 = vmatprep.subr.bf16.mxu0 0
        %505 = vmatpush1.bf16.msra.mxu0 %v450
        %506 = vmatprep.subr.bf16.mxu0 0
        %507 = vmatpush1.bf16.msra.mxu0 0
        %508 = vmatprep.subr.bf16.mxu0 0
        %509 = vmatpush1.bf16.msra.mxu0 0
        %510 = vmatprep.subr.bf16.mxu0 0
        %511 = vmatpush1.bf16.msra.mxu0 0
        %512 = vmatprep.subr.bf16.mxu0 0
        %513 = vmatpush1.bf16.msra.mxu0 0
        %514 = vmatprep.subr.bf16.mxu0 0
        %515 = vmatpush1.bf16.msra.mxu0 0
        %516 = vmatprep.subr.bf16.mxu0 0
        %517 = vmatpush1.bf16.msra.mxu0 0
        %518 = vmatprep.subr.bf16.mxu0 0
        %519 = vmatpush1.bf16.msra.mxu0 0
        %520 = vmatprep.subr.bf16.mxu0 0
        %521 = vmatpush1.bf16.msra.mxu0 0
        %522 = vmatprep.subr.bf16.mxu0 0
        %523 = vmatpush1.bf16.msra.mxu0 0
        %524 = vmatprep.subr.bf16.mxu0 0
        %525 = vmatpush1.bf16.msra.mxu0 0
        %526 = vmatprep.subr.bf16.mxu0 0
        %527 = vmatpush1.bf16.msra.mxu0 0
        %528 = vmatprep.subr.bf16.mxu0 0
        %529 = vmatpush1.bf16.msra.mxu0 0
        %530 = vmatprep.subr.bf16.mxu0 0
        %531 = vmatpush1.bf16.msra.mxu0 0
        %532 = vmatprep.subr.bf16.mxu0 0
        %533 = vmatpush1.bf16.msra.mxu0 0
        %534 = vmatprep.mubr.bf16.mxu0 0
        %535 = vmatmul.mubr.bf16.gmra.mrb[0].mxu0 %v455
        %v536 = vpop.f32.mrb[0].mxu0
        %v537 = vadd.f32 0.0, %v536
        %v538 = vpop.f32.mrb[0].mxu0
        %v539 = vpop.f32.mrb[0].mxu0
        %v540 = vadd.f32 0.0, %v539
        %v541 = vpop.f32.mrb[0].mxu0
        %542 = vmatprep.mubr.bf16.mxu0 0
        %543 = vmatmul.mubr.bf16.gmra.mrb[0].mxu0 %v458
        %v544 = vpop.f32.mrb[0].mxu0
        %v545 = vadd.f32 0.0, %v544
        %v546 = vpop.f32.mrb[0].mxu0
        %v547 = vpop.f32.mrb[0].mxu0
        %v548 = vadd.f32 0.0, %v547
        %v549 = vpop.f32.mrb[0].mxu0
        %550 = vmatprep.mubr.bf16.mxu0 0
        %551 = vmatmul.mubr.bf16.gmra.mrb[0].mxu0 %v461
        %v552 = vpop.f32.mrb[0].mxu0
        %v553 = vadd.f32 0.0, %v552
        %v554 = vpop.f32.mrb[0].mxu0
        %v555 = vpop.f32.mrb[0].mxu0
        %v556 = vadd.f32 0.0, %v555
        %v557 = vpop.f32.mrb[0].mxu0
        %558 = vmatprep.mubr.bf16.mxu0 0
        %559 = vmatmul.mubr.bf16.gmra.mrb[0].mxu0 %v464
        %v560 = vpop.f32.mrb[0].mxu0
        %v561 = vadd.f32 0.0, %v560
        %v562 = vpop.f32.mrb[0].mxu0
        %v563 = vpop.f32.mrb[0].mxu0
        %v564 = vadd.f32 0.0, %v563
        %v565 = vpop.f32.mrb[0].mxu0
        %566 = vmatprep.mubr.bf16.mxu0 0
        %567 = vmatmul.mubr.bf16.gmra.mrb[0].mxu0 %v467
        %v568 = vpop.f32.mrb[0].mxu0
        %v569 = vadd.f32 0.0, %v568
        %v570 = vpop.f32.mrb[0].mxu0
        %v571 = vpop.f32.mrb[0].mxu0
        %v572 = vadd.f32 0.0, %v571
        %v573 = vpop.f32.mrb[0].mxu0
        %574 = vmatprep.mubr.bf16.mxu0 0
        %575 = vmatmul.mubr.bf16.gmra.mrb[0].mxu0 %v470
        %v576 = vpop.f32.mrb[0].mxu0
        %v577 = vadd.f32 0.0, %v576
        %v578 = vpop.f32.mrb[0].mxu0
        %v579 = vpop.f32.mrb[0].mxu0
        %v580 = vadd.f32 0.0, %v579
        %v581 = vpop.f32.mrb[0].mxu0
        %582 = vmatprep.mubr.bf16.mxu0 0
        %583 = vmatmul.mubr.bf16.gmra.mrb[0].mxu0 %v473
        %v584 = vpop.f32.mrb[0].mxu0
        %v585 = vadd.f32 0.0, %v584
        %v586 = vpop.f32.mrb[0].mxu0
        %v587 = vpop.f32.mrb[0].mxu0
        %v588 = vadd.f32 0.0, %v587
        %v589 = vpop.f32.mrb[0].mxu0
        %590 = vmatprep.mubr.bf16.mxu0 0
        %591 = vmatmul.mubr.bf16.gmra.mrb[0].mxu0 %v476
        %v592 = vpop.f32.mrb[0].mxu0
        %v593 = vadd.f32 0.0, %v592
        %v594 = vpop.f32.mrb[0].mxu0
        %v595 = vpop.f32.mrb[0].mxu0
        %v596 = vadd.f32 0.0, %v595
        %v597 = vpop.f32.mrb[0].mxu0
        %598 = vmatprep.mubr.bf16.mxu0 0
        %599 = vmatmul.mubr.bf16.gmra.mrb[0].mxu0 %v479
        %v600 = vpop.f32.mrb[0].mxu0
        %v601 = vadd.f32 0.0, %v600
        %v602 = vpop.f32.mrb[0].mxu0
        %v603 = vpop.f32.mrb[0].mxu0
        %v604 = vadd.f32 0.0, %v603
        %v605 = vpop.f32.mrb[0].mxu0
        %606 = vmatprep.mubr.bf16.mxu0 0
        %607 = vmatmul.mubr.bf16.gmra.mrb[0].mxu0 %v482
        %v608 = vpop.f32.mrb[0].mxu0
        %v609 = vadd.f32 0.0, %v608
        %v610 = vpop.f32.mrb[0].mxu0
        %v611 = vpop.f32.mrb[0].mxu0
        %v612 = vadd.f32 0.0, %v611
        %v613 = vpop.f32.mrb[0].mxu0
        %614 = vmatprep.mubr.bf16.mxu0 0
        %615 = vmatmul.mubr.bf16.gmra.mrb[0].mxu0 %v485
        %v616 = vpop.f32.mrb[0].mxu0
        %v617 = vadd.f32 0.0, %v616
        %v618 = vpop.f32.mrb[0].mxu0
        %v619 = vpop.f32.mrb[0].mxu0
        %v620 = vadd.f32 0.0, %v619
        %v621 = vpop.f32.mrb[0].mxu0
        %622 = vmatprep.mubr.bf16.mxu0 0
        %623 = vmatmul.mubr.bf16.gmra.mrb[0].mxu0 %v488
        %v624 = vpop.f32.mrb[0].mxu0
        %v625 = vadd.f32 0.0, %v624
        %v626 = vpop.f32.mrb[0].mxu0
        %v627 = vpop.f32.mrb[0].mxu0
        %v628 = vadd.f32 0.0, %v627
        %v629 = vpop.f32.mrb[0].mxu0
        %630 = vmatprep.mubr.bf16.mxu0 0
        %631 = vmatmul.mubr.bf16.gmra.mrb[0].mxu0 %v491
        %v632 = vpop.f32.mrb[0].mxu0
        %v633 = vadd.f32 0.0, %v632
        %v634 = vpop.f32.mrb[0].mxu0
        %v635 = vpop.f32.mrb[0].mxu0
        %v636 = vadd.f32 0.0, %v635
        %v637 = vpop.f32.mrb[0].mxu0
        %638 = vmatprep.mubr.bf16.mxu0 0
        %639 = vmatmul.mubr.bf16.gmra.mrb[0].mxu0 %v494
        %v640 = vpop.f32.mrb[0].mxu0
        %v641 = vadd.f32 0.0, %v640
        %v642 = vpop.f32.mrb[0].mxu0
        %v643 = vpop.f32.mrb[0].mxu0
        %v644 = vadd.f32 0.0, %v643
        %v645 = vpop.f32.mrb[0].mxu0
        %646 = vmatprep.mubr.bf16.mxu0 0
        %647 = vmatmul.mubr.bf16.gmra.mrb[0].mxu0 %v497
        %v648 = vpop.f32.mrb[0].mxu0
        %v649 = vadd.f32 0.0, %v648
        %v650 = vpop.f32.mrb[0].mxu0
        %v651 = vpop.f32.mrb[0].mxu0
        %v652 = vadd.f32 0.0, %v651
        %v653 = vpop.f32.mrb[0].mxu0
        %654 = vmatprep.mubr.bf16.mxu0 0
        %655 = vmatmul.mubr.bf16.gmra.mrb[0].mxu0 %v500
        %v656 = vpop.f32.mrb[0].mxu0
        %v657 = vadd.f32 0.0, %v656
        %v658 = vpop.f32.mrb[0].mxu0
        %v659 = vpop.f32.mrb[0].mxu0
        %v660 = vadd.f32 0.0, %v659
        %v661 = vpop.f32.mrb[0].mxu0
        %662 = vdwg.mxu0
        %v663 = vld [vmem:[#allocation5] sm:$0xf]
        %v664 = vld [vmem:[#allocation5 + $0x4] sm:$0xf]
        %v665 = vld [vmem:[#allocation5 + $0x8] sm:$0xf]
        %v666 = vld [vmem:[#allocation5 + $0xc] sm:$0xf]
        %v667 = vpack.c.bf16 %v540, %v537
        %v668 = vpack.c.bf16 %v548, %v545
        %v669 = vpack.c.bf16 %v556, %v553
        %v670 = vpack.c.bf16 %v564, %v561
        %v671 = vpack.c.bf16 %v572, %v569
        %v672 = vpack.c.bf16 %v580, %v577
        %v673 = vpack.c.bf16 %v588, %v585
        %v674 = vpack.c.bf16 %v596, %v593
        %v675 = vpack.c.bf16 %v604, %v601
        %v676 = vpack.c.bf16 %v612, %v609
        %v677 = vpack.c.bf16 %v620, %v617
        %v678 = vpack.c.bf16 %v628, %v625
        %v679 = vpack.c.bf16 %v636, %v633
        %v680 = vpack.c.bf16 %v644, %v641
        %v681 = vpack.c.bf16 %v652, %v649
        %v682 = vpack.c.bf16 %v660, %v657
        %v687 = vunpack.c.l.b16 %v663
        %v688 = vunpack.c.l.b16 %v664
        %v689 = vunpack.c.l.b16 %v665
        %v690 = vunpack.c.l.b16 %v666
        %v691 = vpack.c.b16 %v688, %v687
        %v692 = vpack.c.b16 %v690, %v689
        %v696 = vsel %vm453, %v667, 0
        %v699 = vsel %vm453, %v668, 0
        %v702 = vsel %vm453, %v669, 0
        %v705 = vsel %vm453, %v670, 0
        %v708 = vsel %vm453, %v671, 0
        %v711 = vsel %vm453, %v672, 0
        %v714 = vsel %vm453, %v673, 0
        %v717 = vsel %vm453, %v674, 0
        %v720 = vsel %vm453, %v675, 0
        %v723 = vsel %vm453, %v676, 0
        %v726 = vsel %vm453, %v677, 0
        %v729 = vsel %vm453, %v678, 0
        %v732 = vsel %vm453, %v679, 0
        %v735 = vsel %vm453, %v680, 0
        %v738 = vsel %vm453, %v681, 0
        %v741 = vsel %vm453, %v682, 0
        %743 = vmatprep.subr.bf16.mxu0 0
        %744 = vmatpush1.bf16.msra.mxu0 %v691
        %745 = vmatprep.subr.bf16.mxu0 0
        %746 = vmatpush1.bf16.msra.mxu0 %v692
        %747 = vmatprep.subr.bf16.mxu0 0
        %748 = vmatpush1.bf16.msra.mxu0 0
        %749 = vmatprep.subr.bf16.mxu0 0
        %750 = vmatpush1.bf16.msra.mxu0 0
        %751 = vmatprep.subr.bf16.mxu0 0
        %752 = vmatpush1.bf16.msra.mxu0 0
        %753 = vmatprep.subr.bf16.mxu0 0
        %754 = vmatpush1.bf16.msra.mxu0 0
        %755 = vmatprep.subr.bf16.mxu0 0
        %756 = vmatpush1.bf16.msra.mxu0 0
        %757 = vmatprep.subr.bf16.mxu0 0
        %758 = vmatpush1.bf16.msra.mxu0 0
        %759 = vmatprep.subr.bf16.mxu0 0
        %760 = vmatpush1.bf16.msra.mxu0 0
        %761 = vmatprep.subr.bf16.mxu0 0
        %762 = vmatpush1.bf16.msra.mxu0 0
        %763 = vmatprep.subr.bf16.mxu0 0
        %764 = vmatpush1.bf16.msra.mxu0 0
        %765 = vmatprep.subr.bf16.mxu0 0
        %766 = vmatpush1.bf16.msra.mxu0 0
        %767 = vmatprep.subr.bf16.mxu0 0
        %768 = vmatpush1.bf16.msra.mxu0 0
        %769 = vmatprep.subr.bf16.mxu0 0
        %770 = vmatpush1.bf16.msra.mxu0 0
        %771 = vmatprep.subr.bf16.mxu0 0
        %772 = vmatpush1.bf16.msra.mxu0 0
        %773 = vmatprep.subr.bf16.mxu0 0
        %774 = vmatpush1.bf16.msra.mxu0 0
        %775 = vmatprep.mubr.bf16.mxu0 0
        %776 = vmatmul.mubr.bf16.gmra.mrb[0].mxu0 %v696
        %v777 = vpop.f32.mrb[0].mxu0
        %v778 = vadd.f32 0.0, %v777
        %v779 = vpop.f32.mrb[0].mxu0
        %v780 = vpop.f32.mrb[0].mxu0
        %v781 = vadd.f32 0.0, %v780
        %v782 = vpop.f32.mrb[0].mxu0
        %783 = vmatprep.mubr.bf16.mxu0 0
        %784 = vmatmul.mubr.bf16.gmra.mrb[0].mxu0 %v699
        %v785 = vpop.f32.mrb[0].mxu0
        %v786 = vadd.f32 0.0, %v785
        %v787 = vpop.f32.mrb[0].mxu0
        %v788 = vpop.f32.mrb[0].mxu0
        %v789 = vadd.f32 0.0, %v788
        %v790 = vpop.f32.mrb[0].mxu0
        %791 = vmatprep.mubr.bf16.mxu0 0
        %792 = vmatmul.mubr.bf16.gmra.mrb[0].mxu0 %v702
        %v793 = vpop.f32.mrb[0].mxu0
        %v794 = vadd.f32 0.0, %v793
        %v795 = vpop.f32.mrb[0].mxu0
        %v796 = vpop.f32.mrb[0].mxu0
        %v797 = vadd.f32 0.0, %v796
        %v798 = vpop.f32.mrb[0].mxu0
        %799 = vmatprep.mubr.bf16.mxu0 0
        %800 = vmatmul.mubr.bf16.gmra.mrb[0].mxu0 %v705
        %v801 = vpop.f32.mrb[0].mxu0
        %v802 = vadd.f32 0.0, %v801
        %v803 = vpop.f32.mrb[0].mxu0
        %v804 = vpop.f32.mrb[0].mxu0
        %v805 = vadd.f32 0.0, %v804
        %v806 = vpop.f32.mrb[0].mxu0
        %807 = vmatprep.mubr.bf16.mxu0 0
        %808 = vmatmul.mubr.bf16.gmra.mrb[0].mxu0 %v708
        %v809 = vpop.f32.mrb[0].mxu0
        %v810 = vadd.f32 0.0, %v809
        %v811 = vpop.f32.mrb[0].mxu0
        %v812 = vpop.f32.mrb[0].mxu0
        %v813 = vadd.f32 0.0, %v812
        %v814 = vpop.f32.mrb[0].mxu0
        %815 = vmatprep.mubr.bf16.mxu0 0
        %816 = vmatmul.mubr.bf16.gmra.mrb[0].mxu0 %v711
        %v817 = vpop.f32.mrb[0].mxu0
        %v818 = vadd.f32 0.0, %v817
        %v819 = vpop.f32.mrb[0].mxu0
        %v820 = vpop.f32.mrb[0].mxu0
        %v821 = vadd.f32 0.0, %v820
        %v822 = vpop.f32.mrb[0].mxu0
        %823 = vmatprep.mubr.bf16.mxu0 0
        %824 = vmatmul.mubr.bf16.gmra.mrb[0].mxu0 %v714
        %v825 = vpop.f32.mrb[0].mxu0
        %v826 = vadd.f32 0.0, %v825
        %v827 = vpop.f32.mrb[0].mxu0
        %v828 = vpop.f32.mrb[0].mxu0
        %v829 = vadd.f32 0.0, %v828
        %v830 = vpop.f32.mrb[0].mxu0
        %831 = vmatprep.mubr.bf16.mxu0 0
        %832 = vmatmul.mubr.bf16.gmra.mrb[0].mxu0 %v717
        %v833 = vpop.f32.mrb[0].mxu0
        %v834 = vadd.f32 0.0, %v833
        %v835 = vpop.f32.mrb[0].mxu0
        %v836 = vpop.f32.mrb[0].mxu0
        %v837 = vadd.f32 0.0, %v836
        %v838 = vpop.f32.mrb[0].mxu0
        %839 = vmatprep.mubr.bf16.mxu0 0
        %840 = vmatmul.mubr.bf16.gmra.mrb[0].mxu0 %v720
        %v841 = vpop.f32.mrb[0].mxu0
        %v842 = vadd.f32 0.0, %v841
        %v843 = vpop.f32.mrb[0].mxu0
        %v844 = vpop.f32.mrb[0].mxu0
        %v845 = vadd.f32 0.0, %v844
        %v846 = vpop.f32.mrb[0].mxu0
        %847 = vmatprep.mubr.bf16.mxu0 0
        %848 = vmatmul.mubr.bf16.gmra.mrb[0].mxu0 %v723
        %v849 = vpop.f32.mrb[0].mxu0
        %v850 = vadd.f32 0.0, %v849
        %v851 = vpop.f32.mrb[0].mxu0
        %v852 = vpop.f32.mrb[0].mxu0
        %v853 = vadd.f32 0.0, %v852
        %v854 = vpop.f32.mrb[0].mxu0
        %855 = vmatprep.mubr.bf16.mxu0 0
        %856 = vmatmul.mubr.bf16.gmra.mrb[0].mxu0 %v726
        %v857 = vpop.f32.mrb[0].mxu0
        %v858 = vadd.f32 0.0, %v857
        %v859 = vpop.f32.mrb[0].mxu0
        %v860 = vpop.f32.mrb[0].mxu0
        %v861 = vadd.f32 0.0, %v860
        %v862 = vpop.f32.mrb[0].mxu0
        %863 = vmatprep.mubr.bf16.mxu0 0
        %864 = vmatmul.mubr.bf16.gmra.mrb[0].mxu0 %v729
        %v865 = vpop.f32.mrb[0].mxu0
        %v866 = vadd.f32 0.0, %v865
        %v867 = vpop.f32.mrb[0].mxu0
        %v868 = vpop.f32.mrb[0].mxu0
        %v869 = vadd.f32 0.0, %v868
        %v870 = vpop.f32.mrb[0].mxu0
        %871 = vmatprep.mubr.bf16.mxu0 0
        %872 = vmatmul.mubr.bf16.gmra.mrb[0].mxu0 %v732
        %v873 = vpop.f32.mrb[0].mxu0
        %v874 = vadd.f32 0.0, %v873
        %v875 = vpop.f32.mrb[0].mxu0
        %v876 = vpop.f32.mrb[0].mxu0
        %v877 = vadd.f32 0.0, %v876
        %v878 = vpop.f32.mrb[0].mxu0
        %879 = vmatprep.mubr.bf16.mxu0 0
        %880 = vmatmul.mubr.bf16.gmra.mrb[0].mxu0 %v735
        %v881 = vpop.f32.mrb[0].mxu0
        %v882 = vadd.f32 0.0, %v881
        %v883 = vpop.f32.mrb[0].mxu0
        %v884 = vpop.f32.mrb[0].mxu0
        %v885 = vadd.f32 0.0, %v884
        %v886 = vpop.f32.mrb[0].mxu0
        %887 = vmatprep.mubr.bf16.mxu0 0
        %888 = vmatmul.mubr.bf16.gmra.mrb[0].mxu0 %v738
        %v889 = vpop.f32.mrb[0].mxu0
        %v890 = vadd.f32 0.0, %v889
        %v891 = vpop.f32.mrb[0].mxu0
        %v892 = vpop.f32.mrb[0].mxu0
        %v893 = vadd.f32 0.0, %v892
        %v894 = vpop.f32.mrb[0].mxu0
        %895 = vmatprep.mubr.bf16.mxu0 0
        %896 = vmatmul.mubr.bf16.gmra.mrb[0].mxu0 %v741
        %v897 = vpop.f32.mrb[0].mxu0
        %v898 = vadd.f32 0.0, %v897
        %v899 = vpop.f32.mrb[0].mxu0
        %v900 = vpop.f32.mrb[0].mxu0
        %v901 = vadd.f32 0.0, %v900
        %v902 = vpop.f32.mrb[0].mxu0
        %903 = vdwg.mxu0
        %v904 = vmul.f32 %v778, 0.2
        %v905 = vmul.f32 %v781, 0.2
        %v906 = vmul.f32 %v786, 0.2
        %v907 = vmul.f32 %v789, 0.2
        %v908 = vmul.f32 %v794, 0.2
        %v909 = vmul.f32 %v797, 0.2
        %v910 = vmul.f32 %v802, 0.2
        %v911 = vmul.f32 %v805, 0.2
        %v912 = vmul.f32 %v810, 0.2
        %v913 = vmul.f32 %v813, 0.2
        %v914 = vmul.f32 %v818, 0.2
        %v915 = vmul.f32 %v821, 0.2
        %v916 = vmul.f32 %v826, 0.2
        %v917 = vmul.f32 %v829, 0.2
        %v918 = vmul.f32 %v834, 0.2
        %v919 = vmul.f32 %v837, 0.2
        %v920 = vmul.f32 %v842, 0.2
        %v921 = vmul.f32 %v845, 0.2
        %v922 = vmul.f32 %v850, 0.2
        %v923 = vmul.f32 %v853, 0.2
        %v924 = vmul.f32 %v858, 0.2
        %v925 = vmul.f32 %v861, 0.2
        %v926 = vmul.f32 %v866, 0.2
        %v927 = vmul.f32 %v869, 0.2
        %v928 = vmul.f32 %v874, 0.2
        %v929 = vmul.f32 %v877, 0.2
        %v930 = vmul.f32 %v882, 0.2
        %v931 = vmul.f32 %v885, 0.2
        %v932 = vmul.f32 %v890, 0.2
        %v933 = vmul.f32 %v893, 0.2
        %v934 = vmul.f32 %v898, 0.2
        %v935 = vmul.f32 %v901, 0.2
        %v936 = vmax.f32 %v778, %v904
        %v937 = vmax.f32 %v781, %v905
        %v938 = vmax.f32 %v786, %v906
        %v939 = vmax.f32 %v789, %v907
        %v940 = vmax.f32 %v794, %v908
        %v941 = vmax.f32 %v797, %v909
        %v942 = vmax.f32 %v802, %v910
        %v943 = vmax.f32 %v805, %v911
        %v944 = vmax.f32 %v810, %v912
        %v945 = vmax.f32 %v813, %v913
        %v946 = vmax.f32 %v818, %v914
        %v947 = vmax.f32 %v821, %v915
        %v948 = vmax.f32 %v826, %v916
        %v949 = vmax.f32 %v829, %v917
        %v950 = vmax.f32 %v834, %v918
        %v951 = vmax.f32 %v837, %v919
        %v952 = vmax.f32 %v842, %v920
        %v953 = vmax.f32 %v845, %v921
        %v954 = vmax.f32 %v850, %v922
        %v955 = vmax.f32 %v853, %v923
        %v956 = vmax.f32 %v858, %v924
        %v957 = vmax.f32 %v861, %v925
        %v958 = vmax.f32 %v866, %v926
        %v959 = vmax.f32 %v869, %v927
        %v960 = vmax.f32 %v874, %v928
        %v961 = vmax.f32 %v877, %v929
        %v962 = vmax.f32 %v882, %v930
        %v963 = vmax.f32 %v885, %v931
        %v964 = vmax.f32 %v890, %v932
        %v965 = vmax.f32 %v893, %v933
        %v966 = vmax.f32 %v898, %v934
        %v967 = vmax.f32 %v901, %v935
        %v968 = vld [vmem:[#allocation7] sm:$0xf]
        %v969 = vld [vmem:[#allocation7 + $0x4] sm:$0xf]
        %v970 = vld [vmem:[#allocation7 + $0x8] sm:$0xf]
        %v971 = vld [vmem:[#allocation7 + $0xc] sm:$0xf]
        %v972 = vld [vmem:[#allocation7 + $0x10] sm:$0xf]
        %v973 = vld [vmem:[#allocation7 + $0x14] sm:$0xf]
        %v974 = vld [vmem:[#allocation7 + $0x18] sm:$0xf]
        %v975 = vld [vmem:[#allocation7 + $0x1c] sm:$0xf]
        %v976 = vpack.c.bf16 %v937, %v936
        %v977 = vpack.c.bf16 %v939, %v938
        %v978 = vpack.c.bf16 %v941, %v940
        %v979 = vpack.c.bf16 %v943, %v942
        %v980 = vpack.c.bf16 %v945, %v944
        %v981 = vpack.c.bf16 %v947, %v946
        %v982 = vpack.c.bf16 %v949, %v948
        %v983 = vpack.c.bf16 %v951, %v950
        %v984 = vpack.c.bf16 %v953, %v952
        %v985 = vpack.c.bf16 %v955, %v954
        %v986 = vpack.c.bf16 %v957, %v956
        %v987 = vpack.c.bf16 %v959, %v958
        %v988 = vpack.c.bf16 %v961, %v960
        %v989 = vpack.c.bf16 %v963, %v962
        %v990 = vpack.c.bf16 %v965, %v964
        %v991 = vpack.c.bf16 %v967, %v966
        %v1000 = vunpack.c.l.b16 %v968
        %v1001 = vunpack.c.l.b16 %v969
        %v1002 = vunpack.c.l.b16 %v970
        %v1003 = vunpack.c.l.b16 %v971
        %v1004 = vunpack.c.l.b16 %v972
        %v1005 = vunpack.c.l.b16 %v973
        %v1006 = vunpack.c.l.b16 %v974
        %v1007 = vunpack.c.l.b16 %v975
        %v1008 = vpack.c.b16 %v1001, %v1000
        %v1009 = vpack.c.b16 %v1003, %v1002
        %v1010 = vpack.c.b16 %v1005, %v1004
        %v1011 = vpack.c.b16 %v1007, %v1006
        %vm1016 = vcmask 523264
        %v1018 = vsel %vm1016, %v976, 0
        %v1021 = vsel %vm1016, %v977, 0
        %v1024 = vsel %vm1016, %v978, 0
        %v1027 = vsel %vm1016, %v979, 0
        %v1030 = vsel %vm1016, %v980, 0
        %v1033 = vsel %vm1016, %v981, 0
        %v1036 = vsel %vm1016, %v982, 0
        %v1039 = vsel %vm1016, %v983, 0
        %v1042 = vsel %vm1016, %v984, 0
        %v1045 = vsel %vm1016, %v985, 0
        %v1048 = vsel %vm1016, %v986, 0
        %v1051 = vsel %vm1016, %v987, 0
        %v1054 = vsel %vm1016, %v988, 0
        %v1057 = vsel %vm1016, %v989, 0
        %v1060 = vsel %vm1016, %v990, 0
        %v1063 = vsel %vm1016, %v991, 0
        %1065 = vmatprep.subr.bf16.mxu0 0
        %1066 = vmatpush1.bf16.msra.mxu0 %v1008
        %1067 = vmatprep.subr.bf16.mxu0 0
        %1068 = vmatpush1.bf16.msra.mxu0 %v1009
        %1069 = vmatprep.subr.bf16.mxu0 0
        %1070 = vmatpush1.bf16.msra.mxu0 %v1010
        %1071 = vmatprep.subr.bf16.mxu0 0
        %1072 = vmatpush1.bf16.msra.mxu0 %v1011
        %1073 = vmatprep.subr.bf16.mxu0 0
        %1074 = vmatpush1.bf16.msra.mxu0 0
        %1075 = vmatprep.subr.bf16.mxu0 0
        %1076 = vmatpush1.bf16.msra.mxu0 0
        %1077 = vmatprep.subr.bf16.mxu0 0
        %1078 = vmatpush1.bf16.msra.mxu0 0
        %1079 = vmatprep.subr.bf16.mxu0 0
        %1080 = vmatpush1.bf16.msra.mxu0 0
        %1081 = vmatprep.subr.bf16.mxu0 0
        %1082 = vmatpush1.bf16.msra.mxu0 0
        %1083 = vmatprep.subr.bf16.mxu0 0
        %1084 = vmatpush1.bf16.msra.mxu0 0
        %1085 = vmatprep.subr.bf16.mxu0 0
        %1086 = vmatpush1.bf16.msra.mxu0 0
        %1087 = vmatprep.subr.bf16.mxu0 0
        %1088 = vmatpush1.bf16.msra.mxu0 0
        %1089 = vmatprep.subr.bf16.mxu0 0
        %1090 = vmatpush1.bf16.msra.mxu0 0
        %1091 = vmatprep.subr.bf16.mxu0 0
        %1092 = vmatpush1.bf16.msra.mxu0 0
        %1093 = vmatprep.subr.bf16.mxu0 0
        %1094 = vmatpush1.bf16.msra.mxu0 0
        %1095 = vmatprep.subr.bf16.mxu0 0
        %1096 = vmatpush1.bf16.msra.mxu0 0
        %1097 = vmatprep.mubr.bf16.mxu0 0
        %1098 = vmatmul.mubr.bf16.gmra.mrb[0].mxu0 %v1018
        %v1099 = vpop.f32.mrb[0].mxu0
        %v1100 = vadd.f32 0.0, %v1099
        %v1101 = vpop.f32.mrb[0].mxu0
        %v1102 = vpop.f32.mrb[0].mxu0
        %v1103 = vadd.f32 0.0, %v1102
        %v1104 = vpop.f32.mrb[0].mxu0
        %1105 = vmatprep.mubr.bf16.mxu0 0
        %1106 = vmatmul.mubr.bf16.gmra.mrb[0].mxu0 %v1021
        %v1107 = vpop.f32.mrb[0].mxu0
        %v1108 = vadd.f32 0.0, %v1107
        %v1109 = vpop.f32.mrb[0].mxu0
        %v1110 = vpop.f32.mrb[0].mxu0
        %v1111 = vadd.f32 0.0, %v1110
        %v1112 = vpop.f32.mrb[0].mxu0
        %1113 = vmatprep.mubr.bf16.mxu0 0
        %1114 = vmatmul.mubr.bf16.gmra.mrb[0].mxu0 %v1024
        %v1115 = vpop.f32.mrb[0].mxu0
        %v1116 = vadd.f32 0.0, %v1115
        %v1117 = vpop.f32.mrb[0].mxu0
        %v1118 = vpop.f32.mrb[0].mxu0
        %v1119 = vadd.f32 0.0, %v1118
        %v1120 = vpop.f32.mrb[0].mxu0
        %1121 = vmatprep.mubr.bf16.mxu0 0
        %1122 = vmatmul.mubr.bf16.gmra.mrb[0].mxu0 %v1027
        %v1123 = vpop.f32.mrb[0].mxu0
        %v1124 = vadd.f32 0.0, %v1123
        %v1125 = vpop.f32.mrb[0].mxu0
        %v1126 = vpop.f32.mrb[0].mxu0
        %v1127 = vadd.f32 0.0, %v1126
        %v1128 = vpop.f32.mrb[0].mxu0
        %1129 = vmatprep.mubr.bf16.mxu0 0
        %1130 = vmatmul.mubr.bf16.gmra.mrb[0].mxu0 %v1030
        %v1131 = vpop.f32.mrb[0].mxu0
        %v1132 = vadd.f32 0.0, %v1131
        %v1133 = vpop.f32.mrb[0].mxu0
        %v1134 = vpop.f32.mrb[0].mxu0
        %v1135 = vadd.f32 0.0, %v1134
        %v1136 = vpop.f32.mrb[0].mxu0
        %1137 = vmatprep.mubr.bf16.mxu0 0
        %1138 = vmatmul.mubr.bf16.gmra.mrb[0].mxu0 %v1033
        %v1139 = vpop.f32.mrb[0].mxu0
        %v1140 = vadd.f32 0.0, %v1139
        %v1141 = vpop.f32.mrb[0].mxu0
        %v1142 = vpop.f32.mrb[0].mxu0
        %v1143 = vadd.f32 0.0, %v1142
        %v1144 = vpop.f32.mrb[0].mxu0
        %1145 = vmatprep.mubr.bf16.mxu0 0
        %1146 = vmatmul.mubr.bf16.gmra.mrb[0].mxu0 %v1036
        %v1147 = vpop.f32.mrb[0].mxu0
        %v1148 = vadd.f32 0.0, %v1147
        %v1149 = vpop.f32.mrb[0].mxu0
        %v1150 = vpop.f32.mrb[0].mxu0
        %v1151 = vadd.f32 0.0, %v1150
        %v1152 = vpop.f32.mrb[0].mxu0
        %1153 = vmatprep.mubr.bf16.mxu0 0
        %1154 = vmatmul.mubr.bf16.gmra.mrb[0].mxu0 %v1039
        %v1155 = vpop.f32.mrb[0].mxu0
        %v1156 = vadd.f32 0.0, %v1155
        %v1157 = vpop.f32.mrb[0].mxu0
        %v1158 = vpop.f32.mrb[0].mxu0
        %v1159 = vadd.f32 0.0, %v1158
        %v1160 = vpop.f32.mrb[0].mxu0
        %1161 = vmatprep.mubr.bf16.mxu0 0
        %1162 = vmatmul.mubr.bf16.gmra.mrb[0].mxu0 %v1042
        %v1163 = vpop.f32.mrb[0].mxu0
        %v1164 = vadd.f32 0.0, %v1163
        %v1165 = vpop.f32.mrb[0].mxu0
        %v1166 = vpop.f32.mrb[0].mxu0
        %v1167 = vadd.f32 0.0, %v1166
        %v1168 = vpop.f32.mrb[0].mxu0
        %1169 = vmatprep.mubr.bf16.mxu0 0
        %1170 = vmatmul.mubr.bf16.gmra.mrb[0].mxu0 %v1045
        %v1171 = vpop.f32.mrb[0].mxu0
        %v1172 = vadd.f32 0.0, %v1171
        %v1173 = vpop.f32.mrb[0].mxu0
        %v1174 = vpop.f32.mrb[0].mxu0
        %v1175 = vadd.f32 0.0, %v1174
        %v1176 = vpop.f32.mrb[0].mxu0
        %1177 = vmatprep.mubr.bf16.mxu0 0
        %1178 = vmatmul.mubr.bf16.gmra.mrb[0].mxu0 %v1048
        %v1179 = vpop.f32.mrb[0].mxu0
        %v1180 = vadd.f32 0.0, %v1179
        %v1181 = vpop.f32.mrb[0].mxu0
        %v1182 = vpop.f32.mrb[0].mxu0
        %v1183 = vadd.f32 0.0, %v1182
        %v1184 = vpop.f32.mrb[0].mxu0
        %1185 = vmatprep.mubr.bf16.mxu0 0
        %1186 = vmatmul.mubr.bf16.gmra.mrb[0].mxu0 %v1051
        %v1187 = vpop.f32.mrb[0].mxu0
        %v1188 = vadd.f32 0.0, %v1187
        %v1189 = vpop.f32.mrb[0].mxu0
        %v1190 = vpop.f32.mrb[0].mxu0
        %v1191 = vadd.f32 0.0, %v1190
        %v1192 = vpop.f32.mrb[0].mxu0
        %1193 = vmatprep.mubr.bf16.mxu0 0
        %1194 = vmatmul.mubr.bf16.gmra.mrb[0].mxu0 %v1054
        %v1195 = vpop.f32.mrb[0].mxu0
        %v1196 = vadd.f32 0.0, %v1195
        %v1197 = vpop.f32.mrb[0].mxu0
        %v1198 = vpop.f32.mrb[0].mxu0
        %v1199 = vadd.f32 0.0, %v1198
        %v1200 = vpop.f32.mrb[0].mxu0
        %1201 = vmatprep.mubr.bf16.mxu0 0
        %1202 = vmatmul.mubr.bf16.gmra.mrb[0].mxu0 %v1057
        %v1203 = vpop.f32.mrb[0].mxu0
        %v1204 = vadd.f32 0.0, %v1203
        %v1205 = vpop.f32.mrb[0].mxu0
        %v1206 = vpop.f32.mrb[0].mxu0
        %v1207 = vadd.f32 0.0, %v1206
        %v1208 = vpop.f32.mrb[0].mxu0
        %1209 = vmatprep.mubr.bf16.mxu0 0
        %1210 = vmatmul.mubr.bf16.gmra.mrb[0].mxu0 %v1060
        %v1211 = vpop.f32.mrb[0].mxu0
        %v1212 = vadd.f32 0.0, %v1211
        %v1213 = vpop.f32.mrb[0].mxu0
        %v1214 = vpop.f32.mrb[0].mxu0
        %v1215 = vadd.f32 0.0, %v1214
        %v1216 = vpop.f32.mrb[0].mxu0
        %1217 = vmatprep.mubr.bf16.mxu0 0
        %1218 = vmatmul.mubr.bf16.gmra.mrb[0].mxu0 %v1063
        %v1219 = vpop.f32.mrb[0].mxu0
        %v1220 = vadd.f32 0.0, %v1219
        %v1221 = vpop.f32.mrb[0].mxu0
        %v1222 = vpop.f32.mrb[0].mxu0
        %v1223 = vadd.f32 0.0, %v1222
        %v1224 = vpop.f32.mrb[0].mxu0
        %1225 = vdwg.mxu0
        %v1226 = vmul.f32 %v1100, 0.2
        %v1227 = vmul.f32 %v1103, 0.2
        %v1228 = vmul.f32 %v1108, 0.2
        %v1229 = vmul.f32 %v1111, 0.2
        %v1230 = vmul.f32 %v1116, 0.2
        %v1231 = vmul.f32 %v1119, 0.2
        %v1232 = vmul.f32 %v1124, 0.2
        %v1233 = vmul.f32 %v1127, 0.2
        %v1234 = vmul.f32 %v1132, 0.2
        %v1235 = vmul.f32 %v1135, 0.2
        %v1236 = vmul.f32 %v1140, 0.2
        %v1237 = vmul.f32 %v1143, 0.2
        %v1238 = vmul.f32 %v1148, 0.2
        %v1239 = vmul.f32 %v1151, 0.2
        %v1240 = vmul.f32 %v1156, 0.2
        %v1241 = vmul.f32 %v1159, 0.2
        %v1242 = vmul.f32 %v1164, 0.2
        %v1243 = vmul.f32 %v1167, 0.2
        %v1244 = vmul.f32 %v1172, 0.2
        %v1245 = vmul.f32 %v1175, 0.2
        %v1246 = vmul.f32 %v1180, 0.2
        %v1247 = vmul.f32 %v1183, 0.2
        %v1248 = vmul.f32 %v1188, 0.2
        %v1249 = vmul.f32 %v1191, 0.2
        %v1250 = vmul.f32 %v1196, 0.2
        %v1251 = vmul.f32 %v1199, 0.2
        %v1252 = vmul.f32 %v1204, 0.2
        %v1253 = vmul.f32 %v1207, 0.2
        %v1254 = vmul.f32 %v1212, 0.2
        %v1255 = vmul.f32 %v1215, 0.2
        %v1256 = vmul.f32 %v1220, 0.2
        %v1257 = vmul.f32 %v1223, 0.2
        %v1258 = vmax.f32 %v1100, %v1226
        %v1259 = vmax.f32 %v1103, %v1227
        %v1260 = vmax.f32 %v1108, %v1228
        %v1261 = vmax.f32 %v1111, %v1229
        %v1262 = vmax.f32 %v1116, %v1230
        %v1263 = vmax.f32 %v1119, %v1231
        %v1264 = vmax.f32 %v1124, %v1232
        %v1265 = vmax.f32 %v1127, %v1233
        %v1266 = vmax.f32 %v1132, %v1234
        %v1267 = vmax.f32 %v1135, %v1235
        %v1268 = vmax.f32 %v1140, %v1236
        %v1269 = vmax.f32 %v1143, %v1237
        %v1270 = vmax.f32 %v1148, %v1238
        %v1271 = vmax.f32 %v1151, %v1239
        %v1272 = vmax.f32 %v1156, %v1240
        %v1273 = vmax.f32 %v1159, %v1241
        %v1274 = vmax.f32 %v1164, %v1242
        %v1275 = vmax.f32 %v1167, %v1243
        %v1276 = vmax.f32 %v1172, %v1244
        %v1277 = vmax.f32 %v1175, %v1245
        %v1278 = vmax.f32 %v1180, %v1246
        %v1279 = vmax.f32 %v1183, %v1247
        %v1280 = vmax.f32 %v1188, %v1248
        %v1281 = vmax.f32 %v1191, %v1249
        %v1282 = vmax.f32 %v1196, %v1250
        %v1283 = vmax.f32 %v1199, %v1251
        %v1284 = vmax.f32 %v1204, %v1252
        %v1285 = vmax.f32 %v1207, %v1253
        %v1286 = vmax.f32 %v1212, %v1254
        %v1287 = vmax.f32 %v1215, %v1255
        %v1288 = vmax.f32 %v1220, %v1256
        %v1289 = vmax.f32 %v1223, %v1257
        %v1290 = vld [vmem:[%s4] sm:$0xff]
        %v1291 = vld [vmem:[%s4 + $0x8] sm:$0xff]
        %v1292 = vld [vmem:[%s4 + $0x10] sm:$0xff]
        %v1293 = vld [vmem:[%s4 + $0x18] sm:$0xff]
        %v1294 = vld [vmem:[%s4 + $0x20] sm:$0xff]
        %v1295 = vld [vmem:[%s4 + $0x28] sm:$0xff]
        %v1296 = vld [vmem:[%s4 + $0x30] sm:$0xff]
        %v1297 = vld [vmem:[%s4 + $0x38] sm:$0xff]
        %v1298 = vld [vmem:[%s4 + $0x40] sm:$0xff]
        %v1299 = vld [vmem:[%s4 + $0x48] sm:$0xff]
        %v1300 = vld [vmem:[%s4 + $0x50] sm:$0xff]
        %v1301 = vld [vmem:[%s4 + $0x58] sm:$0xff]
        %v1302 = vld [vmem:[%s4 + $0x60] sm:$0xff]
        %v1303 = vld [vmem:[%s4 + $0x68] sm:$0xff]
        %v1304 = vld [vmem:[%s4 + $0x70] sm:$0xff]
        %v1305 = vld [vmem:[%s4 + $0x78] sm:$0xff]
        %v1306 = vpack.c.bf16 %v1259, %v1258
        %v1307 = vpack.c.bf16 %v1261, %v1260
        %v1308 = vpack.c.bf16 %v1263, %v1262
        %v1309 = vpack.c.bf16 %v1265, %v1264
        %v1310 = vpack.c.bf16 %v1267, %v1266
        %v1311 = vpack.c.bf16 %v1269, %v1268
        %v1312 = vpack.c.bf16 %v1271, %v1270
        %v1313 = vpack.c.bf16 %v1273, %v1272
        %v1314 = vpack.c.bf16 %v1275, %v1274
        %v1315 = vpack.c.bf16 %v1277, %v1276
        %v1316 = vpack.c.bf16 %v1279, %v1278
        %v1317 = vpack.c.bf16 %v1281, %v1280
        %v1318 = vpack.c.bf16 %v1283, %v1282
        %v1319 = vpack.c.bf16 %v1285, %v1284
        %v1320 = vpack.c.bf16 %v1287, %v1286
        %v1321 = vpack.c.bf16 %v1289, %v1288
        %v1338 = vunpack.c.l.b16 %v1290
        %v1339 = vunpack.c.h.b16 %v1290
        %v1340 = vunpack.c.l.b16 %v1291
        %v1341 = vunpack.c.h.b16 %v1291
        %v1342 = vunpack.c.l.b16 %v1292
        %v1343 = vunpack.c.h.b16 %v1292
        %v1344 = vunpack.c.l.b16 %v1293
        %v1345 = vunpack.c.h.b16 %v1293
        %v1346 = vunpack.c.l.b16 %v1294
        %v1347 = vunpack.c.h.b16 %v1294
        %v1348 = vunpack.c.l.b16 %v1295
        %v1349 = vunpack.c.h.b16 %v1295
        %v1350 = vunpack.c.l.b16 %v1296
        %v1351 = vunpack.c.h.b16 %v1296
        %v1352 = vunpack.c.l.b16 %v1297
        %v1353 = vunpack.c.h.b16 %v1297
        %v1354 = vunpack.c.l.b16 %v1298
        %v1355 = vunpack.c.h.b16 %v1298
        %v1356 = vunpack.c.l.b16 %v1299
        %v1357 = vunpack.c.h.b16 %v1299
        %v1358 = vunpack.c.l.b16 %v1300
        %v1359 = vunpack.c.h.b16 %v1300
        %v1360 = vunpack.c.l.b16 %v1301
        %v1361 = vunpack.c.h.b16 %v1301
        %v1362 = vunpack.c.l.b16 %v1302
        %v1363 = vunpack.c.h.b16 %v1302
        %v1364 = vunpack.c.l.b16 %v1303
        %v1365 = vunpack.c.h.b16 %v1303
        %v1366 = vunpack.c.l.b16 %v1304
        %v1367 = vunpack.c.h.b16 %v1304
        %v1368 = vunpack.c.l.b16 %v1305
        %v1369 = vunpack.c.h.b16 %v1305
        %v1370 = vpack.c.b16 %v1340, %v1338
        %v1371 = vpack.c.b16 %v1341, %v1339
        %v1372 = vpack.c.b16 %v1344, %v1342
        %v1373 = vpack.c.b16 %v1345, %v1343
        %v1374 = vpack.c.b16 %v1348, %v1346
        %v1375 = vpack.c.b16 %v1349, %v1347
        %v1376 = vpack.c.b16 %v1352, %v1350
        %v1377 = vpack.c.b16 %v1353, %v1351
        %v1378 = vpack.c.b16 %v1356, %v1354
        %v1379 = vpack.c.b16 %v1357, %v1355
        %v1380 = vpack.c.b16 %v1360, %v1358
        %v1381 = vpack.c.b16 %v1361, %v1359
        %v1382 = vpack.c.b16 %v1364, %v1362
        %v1383 = vpack.c.b16 %v1365, %v1363
        %v1384 = vpack.c.b16 %v1368, %v1366
        %v1385 = vpack.c.b16 %v1369, %v1367
        %1402 = vmatprep.subr.bf16.mxu0 %v1371
        %1403 = vmatpush1.bf16.msra.mxu0 %v1370
        %1404 = vmatprep.subr.bf16.mxu0 %v1373
        %1405 = vmatpush1.bf16.msra.mxu0 %v1372
        %1406 = vmatprep.subr.bf16.mxu0 %v1375
        %1407 = vmatpush1.bf16.msra.mxu0 %v1374
        %1408 = vmatprep.subr.bf16.mxu0 %v1377
        %1409 = vmatpush1.bf16.msra.mxu0 %v1376
        %1410 = vmatprep.subr.bf16.mxu0 %v1379
        %1411 = vmatpush1.bf16.msra.mxu0 %v1378
        %1412 = vmatprep.subr.bf16.mxu0 %v1381
        %1413 = vmatpush1.bf16.msra.mxu0 %v1380
        %1414 = vmatprep.subr.bf16.mxu0 %v1383
        %1415 = vmatpush1.bf16.msra.mxu0 %v1382
        %1416 = vmatprep.subr.bf16.mxu0 %v1385
        %1417 = vmatpush1.bf16.msra.mxu0 %v1384
        %1418 = vmatprep.subr.bf16.mxu0 0
        %1419 = vmatpush1.bf16.msra.mxu0 0
        %1420 = vmatprep.subr.bf16.mxu0 0
        %1421 = vmatpush1.bf16.msra.mxu0 0
        %1422 = vmatprep.subr.bf16.mxu0 0
        %1423 = vmatpush1.bf16.msra.mxu0 0
        %1424 = vmatprep.subr.bf16.mxu0 0
        %1425 = vmatpush1.bf16.msra.mxu0 0
        %1426 = vmatprep.subr.bf16.mxu0 0
        %1427 = vmatpush1.bf16.msra.mxu0 0
        %1428 = vmatprep.subr.bf16.mxu0 0
        %1429 = vmatpush1.bf16.msra.mxu0 0
        %1430 = vmatprep.subr.bf16.mxu0 0
        %1431 = vmatpush1.bf16.msra.mxu0 0
        %1432 = vmatprep.subr.bf16.mxu0 0
        %1433 = vmatpush1.bf16.msra.mxu0 0
        %1434 = vmatprep.mubr.bf16.mxu0 0
        %1435 = vmatmul.mubr.bf16.gmra.mrb[0].mxu0 %v1306
        %v1436 = vpop.f32.mrb[0].mxu0
        %v1437 = vadd.f32 0.0, %v1436
        %v1438 = vpop.f32.mrb[0].mxu0
        %v1439 = vadd.f32 0.0, %v1438
        %v1440 = vpop.f32.mrb[0].mxu0
        %v1441 = vadd.f32 0.0, %v1440
        %v1442 = vpop.f32.mrb[0].mxu0
        %v1443 = vadd.f32 0.0, %v1442
        %1444 = vmatprep.mubr.bf16.mxu0 0
        %1445 = vmatmul.mubr.bf16.gmra.mrb[0].mxu0 %v1307
        %v1446 = vpop.f32.mrb[0].mxu0
        %v1447 = vadd.f32 0.0, %v1446
        %v1448 = vpop.f32.mrb[0].mxu0
        %v1449 = vadd.f32 0.0, %v1448
        %v1450 = vpop.f32.mrb[0].mxu0
        %v1451 = vadd.f32 0.0, %v1450
        %v1452 = vpop.f32.mrb[0].mxu0
        %v1453 = vadd.f32 0.0, %v1452
        %1454 = vmatprep.mubr.bf16.mxu0 0
        %1455 = vmatmul.mubr.bf16.gmra.mrb[0].mxu0 %v1308
        %v1456 = vpop.f32.mrb[0].mxu0
        %v1457 = vadd.f32 0.0, %v1456
        %v1458 = vpop.f32.mrb[0].mxu0
        %v1459 = vadd.f32 0.0, %v1458
        %v1460 = vpop.f32.mrb[0].mxu0
        %v1461 = vadd.f32 0.0, %v1460
        %v1462 = vpop.f32.mrb[0].mxu0
        %v1463 = vadd.f32 0.0, %v1462
        %1464 = vmatprep.mubr.bf16.mxu0 0
        %1465 = vmatmul.mubr.bf16.gmra.mrb[0].mxu0 %v1309
        %v1466 = vpop.f32.mrb[0].mxu0
        %v1467 = vadd.f32 0.0, %v1466
        %v1468 = vpop.f32.mrb[0].mxu0
        %v1469 = vadd.f32 0.0, %v1468
        %v1470 = vpop.f32.mrb[0].mxu0
        %v1471 = vadd.f32 0.0, %v1470
        %v1472 = vpop.f32.mrb[0].mxu0
        %v1473 = vadd.f32 0.0, %v1472
        %1474 = vmatprep.mubr.bf16.mxu0 0
        %1475 = vmatmul.mubr.bf16.gmra.mrb[0].mxu0 %v1310
        %v1476 = vpop.f32.mrb[0].mxu0
        %v1477 = vadd.f32 0.0, %v1476
        %v1478 = vpop.f32.mrb[0].mxu0
        %v1479 = vadd.f32 0.0, %v1478
        %v1480 = vpop.f32.mrb[0].mxu0
        %v1481 = vadd.f32 0.0, %v1480
        %v1482 = vpop.f32.mrb[0].mxu0
        %v1483 = vadd.f32 0.0, %v1482
        %1484 = vmatprep.mubr.bf16.mxu0 0
        %1485 = vmatmul.mubr.bf16.gmra.mrb[0].mxu0 %v1311
        %v1486 = vpop.f32.mrb[0].mxu0
        %v1487 = vadd.f32 0.0, %v1486
        %v1488 = vpop.f32.mrb[0].mxu0
        %v1489 = vadd.f32 0.0, %v1488
        %v1490 = vpop.f32.mrb[0].mxu0
        %v1491 = vadd.f32 0.0, %v1490
        %v1492 = vpop.f32.mrb[0].mxu0
        %v1493 = vadd.f32 0.0, %v1492
        %1494 = vmatprep.mubr.bf16.mxu0 0
        %1495 = vmatmul.mubr.bf16.gmra.mrb[0].mxu0 %v1312
        %v1496 = vpop.f32.mrb[0].mxu0
        %v1497 = vadd.f32 0.0, %v1496
        %v1498 = vpop.f32.mrb[0].mxu0
        %v1499 = vadd.f32 0.0, %v1498
        %v1500 = vpop.f32.mrb[0].mxu0
        %v1501 = vadd.f32 0.0, %v1500
        %v1502 = vpop.f32.mrb[0].mxu0
        %v1503 = vadd.f32 0.0, %v1502
        %1504 = vmatprep.mubr.bf16.mxu0 0
        %1505 = vmatmul.mubr.bf16.gmra.mrb[0].mxu0 %v1313
        %v1506 = vpop.f32.mrb[0].mxu0
        %v1507 = vadd.f32 0.0, %v1506
        %v1508 = vpop.f32.mrb[0].mxu0
        %v1509 = vadd.f32 0.0, %v1508
        %v1510 = vpop.f32.mrb[0].mxu0
        %v1511 = vadd.f32 0.0, %v1510
        %v1512 = vpop.f32.mrb[0].mxu0
        %v1513 = vadd.f32 0.0, %v1512
        %1514 = vmatprep.mubr.bf16.mxu0 0
        %1515 = vmatmul.mubr.bf16.gmra.mrb[0].mxu0 %v1314
        %v1516 = vpop.f32.mrb[0].mxu0
        %v1517 = vadd.f32 0.0, %v1516
        %v1518 = vpop.f32.mrb[0].mxu0
        %v1519 = vadd.f32 0.0, %v1518
        %v1520 = vpop.f32.mrb[0].mxu0
        %v1521 = vadd.f32 0.0, %v1520
        %v1522 = vpop.f32.mrb[0].mxu0
        %v1523 = vadd.f32 0.0, %v1522
        %1524 = vmatprep.mubr.bf16.mxu0 0
        %1525 = vmatmul.mubr.bf16.gmra.mrb[0].mxu0 %v1315
        %v1526 = vpop.f32.mrb[0].mxu0
        %v1527 = vadd.f32 0.0, %v1526
        %v1528 = vpop.f32.mrb[0].mxu0
        %v1529 = vadd.f32 0.0, %v1528
        %v1530 = vpop.f32.mrb[0].mxu0
        %v1531 = vadd.f32 0.0, %v1530
        %v1532 = vpop.f32.mrb[0].mxu0
        %v1533 = vadd.f32 0.0, %v1532
        %1534 = vmatprep.mubr.bf16.mxu0 0
        %1535 = vmatmul.mubr.bf16.gmra.mrb[0].mxu0 %v1316
        %v1536 = vpop.f32.mrb[0].mxu0
        %v1537 = vadd.f32 0.0, %v1536
        %v1538 = vpop.f32.mrb[0].mxu0
        %v1539 = vadd.f32 0.0, %v1538
        %v1540 = vpop.f32.mrb[0].mxu0
        %v1541 = vadd.f32 0.0, %v1540
        %v1542 = vpop.f32.mrb[0].mxu0
        %v1543 = vadd.f32 0.0, %v1542
        %1544 = vmatprep.mubr.bf16.mxu0 0
        %1545 = vmatmul.mubr.bf16.gmra.mrb[0].mxu0 %v1317
        %v1546 = vpop.f32.mrb[0].mxu0
        %v1547 = vadd.f32 0.0, %v1546
        %v1548 = vpop.f32.mrb[0].mxu0
        %v1549 = vadd.f32 0.0, %v1548
        %v1550 = vpop.f32.mrb[0].mxu0
        %v1551 = vadd.f32 0.0, %v1550
        %v1552 = vpop.f32.mrb[0].mxu0
        %v1553 = vadd.f32 0.0, %v1552
        %1554 = vmatprep.mubr.bf16.mxu0 0
        %1555 = vmatmul.mubr.bf16.gmra.mrb[0].mxu0 %v1318
        %v1556 = vpop.f32.mrb[0].mxu0
        %v1557 = vadd.f32 0.0, %v1556
        %v1558 = vpop.f32.mrb[0].mxu0
        %v1559 = vadd.f32 0.0, %v1558
        %v1560 = vpop.f32.mrb[0].mxu0
        %v1561 = vadd.f32 0.0, %v1560
        %v1562 = vpop.f32.mrb[0].mxu0
        %v1563 = vadd.f32 0.0, %v1562
        %1564 = vmatprep.mubr.bf16.mxu0 0
        %1565 = vmatmul.mubr.bf16.gmra.mrb[0].mxu0 %v1319
        %v1566 = vpop.f32.mrb[0].mxu0
        %v1567 = vadd.f32 0.0, %v1566
        %v1568 = vpop.f32.mrb[0].mxu0
        %v1569 = vadd.f32 0.0, %v1568
        %v1570 = vpop.f32.mrb[0].mxu0
        %v1571 = vadd.f32 0.0, %v1570
        %v1572 = vpop.f32.mrb[0].mxu0
        %v1573 = vadd.f32 0.0, %v1572
        %1574 = vmatprep.mubr.bf16.mxu0 0
        %1575 = vmatmul.mubr.bf16.gmra.mrb[0].mxu0 %v1320
        %v1576 = vpop.f32.mrb[0].mxu0
        %v1577 = vadd.f32 0.0, %v1576
        %v1578 = vpop.f32.mrb[0].mxu0
        %v1579 = vadd.f32 0.0, %v1578
        %v1580 = vpop.f32.mrb[0].mxu0
        %v1581 = vadd.f32 0.0, %v1580
        %v1582 = vpop.f32.mrb[0].mxu0
        %v1583 = vadd.f32 0.0, %v1582
        %1584 = vmatprep.mubr.bf16.mxu0 0
        %1585 = vmatmul.mubr.bf16.gmra.mrb[0].mxu0 %v1321
        %v1586 = vpop.f32.mrb[0].mxu0
        %v1587 = vadd.f32 0.0, %v1586
        %v1588 = vpop.f32.mrb[0].mxu0
        %v1589 = vadd.f32 0.0, %v1588
        %v1590 = vpop.f32.mrb[0].mxu0
        %v1591 = vadd.f32 0.0, %v1590
        %v1592 = vpop.f32.mrb[0].mxu0
        %v1593 = vadd.f32 0.0, %v1592
        %1594 = vdwg.mxu0
        %v1595 = vmul.f32 %v1437, 0.2
        %v1596 = vmul.f32 %v1439, 0.2
        %v1597 = vmul.f32 %v1441, 0.2
        %v1598 = vmul.f32 %v1443, 0.2
        %v1599 = vmul.f32 %v1447, 0.2
        %v1600 = vmul.f32 %v1449, 0.2
        %v1601 = vmul.f32 %v1451, 0.2
        %v1602 = vmul.f32 %v1453, 0.2
        %v1603 = vmul.f32 %v1457, 0.2
        %v1604 = vmul.f32 %v1459, 0.2
        %v1605 = vmul.f32 %v1461, 0.2
        %v1606 = vmul.f32 %v1463, 0.2
        %v1607 = vmul.f32 %v1467, 0.2
        %v1608 = vmul.f32 %v1469, 0.2
        %v1609 = vmul.f32 %v1471, 0.2
        %v1610 = vmul.f32 %v1473, 0.2
        %v1611 = vmul.f32 %v1477, 0.2
        %v1612 = vmul.f32 %v1479, 0.2
        %v1613 = vmul.f32 %v1481, 0.2
        %v1614 = vmul.f32 %v1483, 0.2
        %v1615 = vmul.f32 %v1487, 0.2
        %v1616 = vmul.f32 %v1489, 0.2
        %v1617 = vmul.f32 %v1491, 0.2
        %v1618 = vmul.f32 %v1493, 0.2
        %v1619 = vmul.f32 %v1497, 0.2
        %v1620 = vmul.f32 %v1499, 0.2
        %v1621 = vmul.f32 %v1501, 0.2
        %v1622 = vmul.f32 %v1503, 0.2
        %v1623 = vmul.f32 %v1507, 0.2
        %v1624 = vmul.f32 %v1509, 0.2
        %v1625 = vmul.f32 %v1511, 0.2
        %v1626 = vmul.f32 %v1513, 0.2
        %v1627 = vmul.f32 %v1517, 0.2
        %v1628 = vmul.f32 %v1519, 0.2
        %v1629 = vmul.f32 %v1521, 0.2
        %v1630 = vmul.f32 %v1523, 0.2
        %v1631 = vmul.f32 %v1527, 0.2
        %v1632 = vmul.f32 %v1529, 0.2
        %v1633 = vmul.f32 %v1531, 0.2
        %v1634 = vmul.f32 %v1533, 0.2
        %v1635 = vmul.f32 %v1537, 0.2
        %v1636 = vmul.f32 %v1539, 0.2
        %v1637 = vmul.f32 %v1541, 0.2
        %v1638 = vmul.f32 %v1543, 0.2
        %v1639 = vmul.f32 %v1547, 0.2
        %v1640 = vmul.f32 %v1549, 0.2
        %v1641 = vmul.f32 %v1551, 0.2
        %v1642 = vmul.f32 %v1553, 0.2
        %v1643 = vmul.f32 %v1557, 0.2
        %v1644 = vmul.f32 %v1559, 0.2
        %v1645 = vmul.f32 %v1561, 0.2
        %v1646 = vmul.f32 %v1563, 0.2
        %v1647 = vmul.f32 %v1567, 0.2
        %v1648 = vmul.f32 %v1569, 0.2
        %v1649 = vmul.f32 %v1571, 0.2
        %v1650 = vmul.f32 %v1573, 0.2
        %v1651 = vmul.f32 %v1577, 0.2
        %v1652 = vmul.f32 %v1579, 0.2
        %v1653 = vmul.f32 %v1581, 0.2
        %v1654 = vmul.f32 %v1583, 0.2
        %v1655 = vmul.f32 %v1587, 0.2
        %v1656 = vmul.f32 %v1589, 0.2
        %v1657 = vmul.f32 %v1591, 0.2
        %v1658 = vmul.f32 %v1593, 0.2
        %v1659 = vmax.f32 %v1437, %v1595
        %v1660 = vmax.f32 %v1439, %v1596
        %v1661 = vmax.f32 %v1441, %v1597
        %v1662 = vmax.f32 %v1443, %v1598
        %v1663 = vmax.f32 %v1447, %v1599
        %v1664 = vmax.f32 %v1449, %v1600
        %v1665 = vmax.f32 %v1451, %v1601
        %v1666 = vmax.f32 %v1453, %v1602
        %v1667 = vmax.f32 %v1457, %v1603
        %v1668 = vmax.f32 %v1459, %v1604
        %v1669 = vmax.f32 %v1461, %v1605
        %v1670 = vmax.f32 %v1463, %v1606
        %v1671 = vmax.f32 %v1467, %v1607
        %v1672 = vmax.f32 %v1469, %v1608
        %v1673 = vmax.f32 %v1471, %v1609
        %v1674 = vmax.f32 %v1473, %v1610
        %v1675 = vmax.f32 %v1477, %v1611
        %v1676 = vmax.f32 %v1479, %v1612
        %v1677 = vmax.f32 %v1481, %v1613
        %v1678 = vmax.f32 %v1483, %v1614
        %v1679 = vmax.f32 %v1487, %v1615
        %v1680 = vmax.f32 %v1489, %v1616
        %v1681 = vmax.f32 %v1491, %v1617
        %v1682 = vmax.f32 %v1493, %v1618
        %v1683 = vmax.f32 %v1497, %v1619
        %v1684 = vmax.f32 %v1499, %v1620
        %v1685 = vmax.f32 %v1501, %v1621
        %v1686 = vmax.f32 %v1503, %v1622
        %v1687 = vmax.f32 %v1507, %v1623
        %v1688 = vmax.f32 %v1509, %v1624
        %v1689 = vmax.f32 %v1511, %v1625
        %v1690 = vmax.f32 %v1513, %v1626
        %v1691 = vmax.f32 %v1517, %v1627
        %v1692 = vmax.f32 %v1519, %v1628
        %v1693 = vmax.f32 %v1521, %v1629
        %v1694 = vmax.f32 %v1523, %v1630
        %v1695 = vmax.f32 %v1527, %v1631
        %v1696 = vmax.f32 %v1529, %v1632
        %v1697 = vmax.f32 %v1531, %v1633
        %v1698 = vmax.f32 %v1533, %v1634
        %v1699 = vmax.f32 %v1537, %v1635
        %v1700 = vmax.f32 %v1539, %v1636
        %v1701 = vmax.f32 %v1541, %v1637
        %v1702 = vmax.f32 %v1543, %v1638
        %v1703 = vmax.f32 %v1547, %v1639
        %v1704 = vmax.f32 %v1549, %v1640
        %v1705 = vmax.f32 %v1551, %v1641
        %v1706 = vmax.f32 %v1553, %v1642
        %v1707 = vmax.f32 %v1557, %v1643
        %v1708 = vmax.f32 %v1559, %v1644
        %v1709 = vmax.f32 %v1561, %v1645
        %v1710 = vmax.f32 %v1563, %v1646
        %v1711 = vmax.f32 %v1567, %v1647
        %v1712 = vmax.f32 %v1569, %v1648
        %v1713 = vmax.f32 %v1571, %v1649
        %v1714 = vmax.f32 %v1573, %v1650
        %v1715 = vmax.f32 %v1577, %v1651
        %v1716 = vmax.f32 %v1579, %v1652
        %v1717 = vmax.f32 %v1581, %v1653
        %v1718 = vmax.f32 %v1583, %v1654
        %v1719 = vmax.f32 %v1587, %v1655
        %v1720 = vmax.f32 %v1589, %v1656
        %v1721 = vmax.f32 %v1591, %v1657
        %v1722 = vmax.f32 %v1593, %v1658
        %v1723 = vld [vmem:[%s5] sm:$0xff]
        %v1724 = vld [vmem:[%s5 + $0x8] sm:$0xff]
        %v1725 = vld [vmem:[%s5 + $0x10] sm:$0xff]
        %v1726 = vld [vmem:[%s5 + $0x18] sm:$0xff]
        %v1727 = vld [vmem:[%s5 + $0x20] sm:$0xff]
        %v1728 = vld [vmem:[%s5 + $0x28] sm:$0xff]
        %v1729 = vld [vmem:[%s5 + $0x30] sm:$0xff]
        %v1730 = vld [vmem:[%s5 + $0x38] sm:$0xff]
        %v1731 = vld [vmem:[%s5 + $0x40] sm:$0xff]
        %v1732 = vld [vmem:[%s5 + $0x48] sm:$0xff]
        %v1733 = vld [vmem:[%s5 + $0x50] sm:$0xff]
        %v1734 = vld [vmem:[%s5 + $0x58] sm:$0xff]
        %v1735 = vld [vmem:[%s5 + $0x60] sm:$0xff]
        %v1736 = vld [vmem:[%s5 + $0x68] sm:$0xff]
        %v1737 = vld [vmem:[%s5 + $0x70] sm:$0xff]
        %v1738 = vld [vmem:[%s5 + $0x78] sm:$0xff]
        %v1739 = vld [vmem:[%s5 + $0x80] sm:$0xff]
        %v1740 = vld [vmem:[%s5 + $0x88] sm:$0xff]
        %v1741 = vld [vmem:[%s5 + $0x90] sm:$0xff]
        %v1742 = vld [vmem:[%s5 + $0x98] sm:$0xff]
        %v1743 = vld [vmem:[%s5 + $0xa0] sm:$0xff]
        %v1744 = vld [vmem:[%s5 + $0xa8] sm:$0xff]
        %v1745 = vld [vmem:[%s5 + $0xb0] sm:$0xff]
        %v1746 = vld [vmem:[%s5 + $0xb8] sm:$0xff]
        %v1747 = vld [vmem:[%s5 + $0xc0] sm:$0xff]
        %v1748 = vld [vmem:[%s5 + $0xc8] sm:$0xff]
        %v1749 = vld [vmem:[%s5 + $0xd0] sm:$0xff]
        %v1750 = vld [vmem:[%s5 + $0xd8] sm:$0xff]
        %v1751 = vld [vmem:[%s5 + $0xe0] sm:$0xff]
        %v1752 = vld [vmem:[%s5 + $0xe8] sm:$0xff]
        %v1753 = vld [vmem:[%s5 + $0xf0] sm:$0xff]
        %v1754 = vld [vmem:[%s5 + $0xf8] sm:$0xff]
        %v1755 = vpack.c.bf16 %v1661, %v1659
        %v1756 = vpack.c.bf16 %v1662, %v1660
        %v1757 = vpack.c.bf16 %v1665, %v1663
        %v1758 = vpack.c.bf16 %v1666, %v1664
        %v1759 = vpack.c.bf16 %v1669, %v1667
        %v1760 = vpack.c.bf16 %v1670, %v1668
        %v1761 = vpack.c.bf16 %v1673, %v1671
        %v1762 = vpack.c.bf16 %v1674, %v1672
        %v1763 = vpack.c.bf16 %v1677, %v1675
        %v1764 = vpack.c.bf16 %v1678, %v1676
        %v1765 = vpack.c.bf16 %v1681, %v1679
        %v1766 = vpack.c.bf16 %v1682, %v1680
        %v1767 = vpack.c.bf16 %v1685, %v1683
        %v1768 = vpack.c.bf16 %v1686, %v1684
        %v1769 = vpack.c.bf16 %v1689, %v1687
        %v1770 = vpack.c.bf16 %v1690, %v1688
        %v1771 = vpack.c.bf16 %v1693, %v1691
        %v1772 = vpack.c.bf16 %v1694, %v1692
        %v1773 = vpack.c.bf16 %v1697, %v1695
        %v1774 = vpack.c.bf16 %v1698, %v1696
        %v1775 = vpack.c.bf16 %v1701, %v1699
        %v1776 = vpack.c.bf16 %v1702, %v1700
        %v1777 = vpack.c.bf16 %v1705, %v1703
        %v1778 = vpack.c.bf16 %v1706, %v1704
        %v1779 = vpack.c.bf16 %v1709, %v1707
        %v1780 = vpack.c.bf16 %v1710, %v1708
        %v1781 = vpack.c.bf16 %v1713, %v1711
        %v1782 = vpack.c.bf16 %v1714, %v1712
        %v1783 = vpack.c.bf16 %v1717, %v1715
        %v1784 = vpack.c.bf16 %v1718, %v1716
        %v1785 = vpack.c.bf16 %v1721, %v1719
        %v1786 = vpack.c.bf16 %v1722, %v1720
        %v1819 = vunpack.c.l.b16 %v1723
        %v1820 = vunpack.c.h.b16 %v1723
        %v1821 = vunpack.c.l.b16 %v1724
        %v1822 = vunpack.c.h.b16 %v1724
        %v1823 = vunpack.c.l.b16 %v1725
        %v1824 = vunpack.c.h.b16 %v1725
        %v1825 = vunpack.c.l.b16 %v1726
        %v1826 = vunpack.c.h.b16 %v1726
        %v1827 = vunpack.c.l.b16 %v1727
        %v1828 = vunpack.c.h.b16 %v1727
        %v1829 = vunpack.c.l.b16 %v1728
        %v1830 = vunpack.c.h.b16 %v1728
        %v1831 = vunpack.c.l.b16 %v1729
        %v1832 = vunpack.c.h.b16 %v1729
        %v1833 = vunpack.c.l.b16 %v1730
        %v1834 = vunpack.c.h.b16 %v1730
        %v1835 = vunpack.c.l.b16 %v1731
        %v1836 = vunpack.c.h.b16 %v1731
        %v1837 = vunpack.c.l.b16 %v1732
        %v1838 = vunpack.c.h.b16 %v1732
        %v1839 = vunpack.c.l.b16 %v1733
        %v1840 = vunpack.c.h.b16 %v1733
        %v1841 = vunpack.c.l.b16 %v1734
        %v1842 = vunpack.c.h.b16 %v1734
        %v1843 = vunpack.c.l.b16 %v1735
        %v1844 = vunpack.c.h.b16 %v1735
        %v1845 = vunpack.c.l.b16 %v1736
        %v1846 = vunpack.c.h.b16 %v1736
        %v1847 = vunpack.c.l.b16 %v1737
        %v1848 = vunpack.c.h.b16 %v1737
        %v1849 = vunpack.c.l.b16 %v1738
        %v1850 = vunpack.c.h.b16 %v1738
        %v1851 = vunpack.c.l.b16 %v1739
        %v1852 = vunpack.c.h.b16 %v1739
        %v1853 = vunpack.c.l.b16 %v1740
        %v1854 = vunpack.c.h.b16 %v1740
        %v1855 = vunpack.c.l.b16 %v1741
        %v1856 = vunpack.c.h.b16 %v1741
        %v1857 = vunpack.c.l.b16 %v1742
        %v1858 = vunpack.c.h.b16 %v1742
        %v1859 = vunpack.c.l.b16 %v1743
        %v1860 = vunpack.c.h.b16 %v1743
        %v1861 = vunpack.c.l.b16 %v1744
        %v1862 = vunpack.c.h.b16 %v1744
        %v1863 = vunpack.c.l.b16 %v1745
        %v1864 = vunpack.c.h.b16 %v1745
        %v1865 = vunpack.c.l.b16 %v1746
        %v1866 = vunpack.c.h.b16 %v1746
        %v1867 = vunpack.c.l.b16 %v1747
        %v1868 = vunpack.c.h.b16 %v1747
        %v1869 = vunpack.c.l.b16 %v1748
        %v1870 = vunpack.c.h.b16 %v1748
        %v1871 = vunpack.c.l.b16 %v1749
        %v1872 = vunpack.c.h.b16 %v1749
        %v1873 = vunpack.c.l.b16 %v1750
        %v1874 = vunpack.c.h.b16 %v1750
        %v1875 = vunpack.c.l.b16 %v1751
        %v1876 = vunpack.c.h.b16 %v1751
        %v1877 = vunpack.c.l.b16 %v1752
        %v1878 = vunpack.c.h.b16 %v1752
        %v1879 = vunpack.c.l.b16 %v1753
        %v1880 = vunpack.c.h.b16 %v1753
        %v1881 = vunpack.c.l.b16 %v1754
        %v1882 = vunpack.c.h.b16 %v1754
        %v1883 = vpack.c.b16 %v1821, %v1819
        %v1884 = vpack.c.b16 %v1822, %v1820
        %v1885 = vpack.c.b16 %v1825, %v1823
        %v1886 = vpack.c.b16 %v1826, %v1824
        %v1887 = vpack.c.b16 %v1829, %v1827
        %v1888 = vpack.c.b16 %v1830, %v1828
        %v1889 = vpack.c.b16 %v1833, %v1831
        %v1890 = vpack.c.b16 %v1834, %v1832
        %v1891 = vpack.c.b16 %v1837, %v1835
        %v1892 = vpack.c.b16 %v1838, %v1836
        %v1893 = vpack.c.b16 %v1841, %v1839
        %v1894 = vpack.c.b16 %v1842, %v1840
        %v1895 = vpack.c.b16 %v1845, %v1843
        %v1896 = vpack.c.b16 %v1846, %v1844
        %v1897 = vpack.c.b16 %v1849, %v1847
        %v1898 = vpack.c.b16 %v1850, %v1848
        %v1899 = vpack.c.b16 %v1853, %v1851
        %v1900 = vpack.c.b16 %v1854, %v1852
        %v1901 = vpack.c.b16 %v1857, %v1855
        %v1902 = vpack.c.b16 %v1858, %v1856
        %v1903 = vpack.c.b16 %v1861, %v1859
        %v1904 = vpack.c.b16 %v1862, %v1860
        %v1905 = vpack.c.b16 %v1865, %v1863
        %v1906 = vpack.c.b16 %v1866, %v1864
        %v1907 = vpack.c.b16 %v1869, %v1867
        %v1908 = vpack.c.b16 %v1870, %v1868
        %v1909 = vpack.c.b16 %v1873, %v1871
        %v1910 = vpack.c.b16 %v1874, %v1872
        %v1911 = vpack.c.b16 %v1877, %v1875
        %v1912 = vpack.c.b16 %v1878, %v1876
        %v1913 = vpack.c.b16 %v1881, %v1879
        %v1914 = vpack.c.b16 %v1882, %v1880
        %1947 = vmatprep.subr.bf16.mxu0 %v1884
        %1948 = vmatpush1.bf16.msra.mxu0 %v1883
        %1949 = vmatprep.subr.bf16.mxu0 %v1886
        %1950 = vmatpush1.bf16.msra.mxu0 %v1885
        %1951 = vmatprep.subr.bf16.mxu0 %v1888
        %1952 = vmatpush1.bf16.msra.mxu0 %v1887
        %1953 = vmatprep.subr.bf16.mxu0 %v1890
        %1954 = vmatpush1.bf16.msra.mxu0 %v1889
        %1955 = vmatprep.subr.bf16.mxu0 %v1892
        %1956 = vmatpush1.bf16.msra.mxu0 %v1891
        %1957 = vmatprep.subr.bf16.mxu0 %v1894
        %1958 = vmatpush1.bf16.msra.mxu0 %v1893
        %1959 = vmatprep.subr.bf16.mxu0 %v1896
        %1960 = vmatpush1.bf16.msra.mxu0 %v1895
        %1961 = vmatprep.subr.bf16.mxu0 %v1898
        %1962 = vmatpush1.bf16.msra.mxu0 %v1897
        %1963 = vmatprep.subr.bf16.mxu0 %v1900
        %1964 = vmatpush1.bf16.msra.mxu0 %v1899
        %1965 = vmatprep.subr.bf16.mxu0 %v1902
        %1966 = vmatpush1.bf16.msra.mxu0 %v1901
        %1967 = vmatprep.subr.bf16.mxu0 %v1904
        %1968 = vmatpush1.bf16.msra.mxu0 %v1903
        %1969 = vmatprep.subr.bf16.mxu0 %v1906
        %1970 = vmatpush1.bf16.msra.mxu0 %v1905
        %1971 = vmatprep.subr.bf16.mxu0 %v1908
        %1972 = vmatpush1.bf16.msra.mxu0 %v1907
        %1973 = vmatprep.subr.bf16.mxu0 %v1910
        %1974 = vmatpush1.bf16.msra.mxu0 %v1909
        %1975 = vmatprep.subr.bf16.mxu0 %v1912
        %1976 = vmatpush1.bf16.msra.mxu0 %v1911
        %1977 = vmatprep.subr.bf16.mxu0 %v1914
        %1978 = vmatpush1.bf16.msra.mxu0 %v1913
        %1979 = vmatprep.mubr.bf16.mxu0 %v1756
        %1980 = vmatmul.mubr.bf16.gmra.mrb[0].mxu0 %v1755
        %v1981 = vpop.f32.mrb[0].mxu0
        %v1982 = vadd.f32 0.0, %v1981
        %v1983 = vpop.f32.mrb[0].mxu0
        %v1984 = vadd.f32 0.0, %v1983
        %v1985 = vpop.f32.mrb[0].mxu0
        %v1986 = vadd.f32 0.0, %v1985
        %v1987 = vpop.f32.mrb[0].mxu0
        %v1988 = vadd.f32 0.0, %v1987
        %1989 = vmatprep.mubr.bf16.mxu0 %v1758
        %1990 = vmatmul.mubr.bf16.gmra.mrb[0].mxu0 %v1757
        %v1991 = vpop.f32.mrb[0].mxu0
        %v1992 = vadd.f32 0.0, %v1991
        %v1993 = vpop.f32.mrb[0].mxu0
        %v1994 = vadd.f32 0.0, %v1993
        %v1995 = vpop.f32.mrb[0].mxu0
        %v1996 = vadd.f32 0.0, %v1995
        %v1997 = vpop.f32.mrb[0].mxu0
        %v1998 = vadd.f32 0.0, %v1997
        %1999 = vmatprep.mubr.bf16.mxu0 %v1760
        %2000 = vmatmul.mubr.bf16.gmra.mrb[0].mxu0 %v1759
        %v2001 = vpop.f32.mrb[0].mxu0
        %v2002 = vadd.f32 0.0, %v2001
        %v2003 = vpop.f32.mrb[0].mxu0
        %v2004 = vadd.f32 0.0, %v2003
        %v2005 = vpop.f32.mrb[0].mxu0
        %v2006 = vadd.f32 0.0, %v2005
        %v2007 = vpop.f32.mrb[0].mxu0
        %v2008 = vadd.f32 0.0, %v2007
        %2009 = vmatprep.mubr.bf16.mxu0 %v1762
        %2010 = vmatmul.mubr.bf16.gmra.mrb[0].mxu0 %v1761
        %v2011 = vpop.f32.mrb[0].mxu0
        %v2012 = vadd.f32 0.0, %v2011
        %v2013 = vpop.f32.mrb[0].mxu0
        %v2014 = vadd.f32 0.0, %v2013
        %v2015 = vpop.f32.mrb[0].mxu0
        %v2016 = vadd.f32 0.0, %v2015
        %v2017 = vpop.f32.mrb[0].mxu0
        %v2018 = vadd.f32 0.0, %v2017
        %2019 = vmatprep.mubr.bf16.mxu0 %v1764
        %2020 = vmatmul.mubr.bf16.gmra.mrb[0].mxu0 %v1763
        %v2021 = vpop.f32.mrb[0].mxu0
        %v2022 = vadd.f32 0.0, %v2021
        %v2023 = vpop.f32.mrb[0].mxu0
        %v2024 = vadd.f32 0.0, %v2023
        %v2025 = vpop.f32.mrb[0].mxu0
        %v2026 = vadd.f32 0.0, %v2025
        %v2027 = vpop.f32.mrb[0].mxu0
        %v2028 = vadd.f32 0.0, %v2027
        %2029 = vmatprep.mubr.bf16.mxu0 %v1766
        %2030 = vmatmul.mubr.bf16.gmra.mrb[0].mxu0 %v1765
        %v2031 = vpop.f32.mrb[0].mxu0
        %v2032 = vadd.f32 0.0, %v2031
        %v2033 = vpop.f32.mrb[0].mxu0
        %v2034 = vadd.f32 0.0, %v2033
        %v2035 = vpop.f32.mrb[0].mxu0
        %v2036 = vadd.f32 0.0, %v2035
        %v2037 = vpop.f32.mrb[0].mxu0
        %v2038 = vadd.f32 0.0, %v2037
        %2039 = vmatprep.mubr.bf16.mxu0 %v1768
        %2040 = vmatmul.mubr.bf16.gmra.mrb[0].mxu0 %v1767
        %v2041 = vpop.f32.mrb[0].mxu0
        %v2042 = vadd.f32 0.0, %v2041
        %v2043 = vpop.f32.mrb[0].mxu0
        %v2044 = vadd.f32 0.0, %v2043
        %v2045 = vpop.f32.mrb[0].mxu0
        %v2046 = vadd.f32 0.0, %v2045
        %v2047 = vpop.f32.mrb[0].mxu0
        %v2048 = vadd.f32 0.0, %v2047
        %2049 = vmatprep.mubr.bf16.mxu0 %v1770
        %2050 = vmatmul.mubr.bf16.gmra.mrb[0].mxu0 %v1769
        %v2051 = vpop.f32.mrb[0].mxu0
        %v2052 = vadd.f32 0.0, %v2051
        %v2053 = vpop.f32.mrb[0].mxu0
        %v2054 = vadd.f32 0.0, %v2053
        %v2055 = vpop.f32.mrb[0].mxu0
        %v2056 = vadd.f32 0.0, %v2055
        %v2057 = vpop.f32.mrb[0].mxu0
        %v2058 = vadd.f32 0.0, %v2057
        %2059 = vmatprep.mubr.bf16.mxu0 %v1772
        %2060 = vmatmul.mubr.bf16.gmra.mrb[0].mxu0 %v1771
        %v2061 = vpop.f32.mrb[0].mxu0
        %v2062 = vadd.f32 0.0, %v2061
        %v2063 = vpop.f32.mrb[0].mxu0
        %v2064 = vadd.f32 0.0, %v2063
        %v2065 = vpop.f32.mrb[0].mxu0
        %v2066 = vadd.f32 0.0, %v2065
        %v2067 = vpop.f32.mrb[0].mxu0
        %v2068 = vadd.f32 0.0, %v2067
        %2069 = vmatprep.mubr.bf16.mxu0 %v1774
        %2070 = vmatmul.mubr.bf16.gmra.mrb[0].mxu0 %v1773
        %v2071 = vpop.f32.mrb[0].mxu0
        %v2072 = vadd.f32 0.0, %v2071
        %v2073 = vpop.f32.mrb[0].mxu0
        %v2074 = vadd.f32 0.0, %v2073
        %v2075 = vpop.f32.mrb[0].mxu0
        %v2076 = vadd.f32 0.0, %v2075
        %v2077 = vpop.f32.mrb[0].mxu0
        %v2078 = vadd.f32 0.0, %v2077
        %2079 = vmatprep.mubr.bf16.mxu0 %v1776
        %2080 = vmatmul.mubr.bf16.gmra.mrb[0].mxu0 %v1775
        %v2081 = vpop.f32.mrb[0].mxu0
        %v2082 = vadd.f32 0.0, %v2081
        %v2083 = vpop.f32.mrb[0].mxu0
        %v2084 = vadd.f32 0.0, %v2083
        %v2085 = vpop.f32.mrb[0].mxu0
        %v2086 = vadd.f32 0.0, %v2085
        %v2087 = vpop.f32.mrb[0].mxu0
        %v2088 = vadd.f32 0.0, %v2087
        %2089 = vmatprep.mubr.bf16.mxu0 %v1778
        %2090 = vmatmul.mubr.bf16.gmra.mrb[0].mxu0 %v1777
        %v2091 = vpop.f32.mrb[0].mxu0
        %v2092 = vadd.f32 0.0, %v2091
        %v2093 = vpop.f32.mrb[0].mxu0
        %v2094 = vadd.f32 0.0, %v2093
        %v2095 = vpop.f32.mrb[0].mxu0
        %v2096 = vadd.f32 0.0, %v2095
        %v2097 = vpop.f32.mrb[0].mxu0
        %v2098 = vadd.f32 0.0, %v2097
        %2099 = vmatprep.mubr.bf16.mxu0 %v1780
        %2100 = vmatmul.mubr.bf16.gmra.mrb[0].mxu0 %v1779
        %v2101 = vpop.f32.mrb[0].mxu0
        %v2102 = vadd.f32 0.0, %v2101
        %v2103 = vpop.f32.mrb[0].mxu0
        %v2104 = vadd.f32 0.0, %v2103
        %v2105 = vpop.f32.mrb[0].mxu0
        %v2106 = vadd.f32 0.0, %v2105
        %v2107 = vpop.f32.mrb[0].mxu0
        %v2108 = vadd.f32 0.0, %v2107
        %2109 = vmatprep.mubr.bf16.mxu0 %v1782
        %2110 = vmatmul.mubr.bf16.gmra.mrb[0].mxu0 %v1781
        %v2111 = vpop.f32.mrb[0].mxu0
        %v2112 = vadd.f32 0.0, %v2111
        %v2113 = vpop.f32.mrb[0].mxu0
        %v2114 = vadd.f32 0.0, %v2113
        %v2115 = vpop.f32.mrb[0].mxu0
        %v2116 = vadd.f32 0.0, %v2115
        %v2117 = vpop.f32.mrb[0].mxu0
        %v2118 = vadd.f32 0.0, %v2117
        %2119 = vmatprep.mubr.bf16.mxu0 %v1784
        %2120 = vmatmul.mubr.bf16.gmra.mrb[0].mxu0 %v1783
        %v2121 = vpop.f32.mrb[0].mxu0
        %v2122 = vadd.f32 0.0, %v2121
        %v2123 = vpop.f32.mrb[0].mxu0
        %v2124 = vadd.f32 0.0, %v2123
        %v2125 = vpop.f32.mrb[0].mxu0
        %v2126 = vadd.f32 0.0, %v2125
        %v2127 = vpop.f32.mrb[0].mxu0
        %v2128 = vadd.f32 0.0, %v2127
        %2129 = vmatprep.mubr.bf16.mxu0 %v1786
        %2130 = vmatmul.mubr.bf16.gmra.mrb[0].mxu0 %v1785
        %v2131 = vpop.f32.mrb[0].mxu0
        %v2132 = vadd.f32 0.0, %v2131
        %v2133 = vpop.f32.mrb[0].mxu0
        %v2134 = vadd.f32 0.0, %v2133
        %v2135 = vpop.f32.mrb[0].mxu0
        %v2136 = vadd.f32 0.0, %v2135
        %v2137 = vpop.f32.mrb[0].mxu0
        %v2138 = vadd.f32 0.0, %v2137
        %2139 = vdwg.mxu0
        %v2140 = vmul.f32 %v1982, 0.2
        %v2141 = vmul.f32 %v1984, 0.2
        %v2142 = vmul.f32 %v1986, 0.2
        %v2143 = vmul.f32 %v1988, 0.2
        %v2144 = vmul.f32 %v1992, 0.2
        %v2145 = vmul.f32 %v1994, 0.2
        %v2146 = vmul.f32 %v1996, 0.2
        %v2147 = vmul.f32 %v1998, 0.2
        %v2148 = vmul.f32 %v2002, 0.2
        %v2149 = vmul.f32 %v2004, 0.2
        %v2150 = vmul.f32 %v2006, 0.2
        %v2151 = vmul.f32 %v2008, 0.2
        %v2152 = vmul.f32 %v2012, 0.2
        %v2153 = vmul.f32 %v2014, 0.2
        %v2154 = vmul.f32 %v2016, 0.2
        %v2155 = vmul.f32 %v2018, 0.2
        %v2156 = vmul.f32 %v2022, 0.2
        %v2157 = vmul.f32 %v2024, 0.2
        %v2158 = vmul.f32 %v2026, 0.2
        %v2159 = vmul.f32 %v2028, 0.2
        %v2160 = vmul.f32 %v2032, 0.2
        %v2161 = vmul.f32 %v2034, 0.2
        %v2162 = vmul.f32 %v2036, 0.2
        %v2163 = vmul.f32 %v2038, 0.2
        %v2164 = vmul.f32 %v2042, 0.2
        %v2165 = vmul.f32 %v2044, 0.2
        %v2166 = vmul.f32 %v2046, 0.2
        %v2167 = vmul.f32 %v2048, 0.2
        %v2168 = vmul.f32 %v2052, 0.2
        %v2169 = vmul.f32 %v2054, 0.2
        %v2170 = vmul.f32 %v2056, 0.2
        %v2171 = vmul.f32 %v2058, 0.2
        %v2172 = vmul.f32 %v2062, 0.2
        %v2173 = vmul.f32 %v2064, 0.2
        %v2174 = vmul.f32 %v2066, 0.2
        %v2175 = vmul.f32 %v2068, 0.2
        %v2176 = vmul.f32 %v2072, 0.2
        %v2177 = vmul.f32 %v2074, 0.2
        %v2178 = vmul.f32 %v2076, 0.2
        %v2179 = vmul.f32 %v2078, 0.2
        %v2180 = vmul.f32 %v2082, 0.2
        %v2181 = vmul.f32 %v2084, 0.2
        %v2182 = vmul.f32 %v2086, 0.2
        %v2183 = vmul.f32 %v2088, 0.2
        %v2184 = vmul.f32 %v2092, 0.2
        %v2185 = vmul.f32 %v2094, 0.2
        %v2186 = vmul.f32 %v2096, 0.2
        %v2187 = vmul.f32 %v2098, 0.2
        %v2188 = vmul.f32 %v2102, 0.2
        %v2189 = vmul.f32 %v2104, 0.2
        %v2190 = vmul.f32 %v2106, 0.2
        %v2191 = vmul.f32 %v2108, 0.2
        %v2192 = vmul.f32 %v2112, 0.2
        %v2193 = vmul.f32 %v2114, 0.2
        %v2194 = vmul.f32 %v2116, 0.2
        %v2195 = vmul.f32 %v2118, 0.2
        %v2196 = vmul.f32 %v2122, 0.2
        %v2197 = vmul.f32 %v2124, 0.2
        %v2198 = vmul.f32 %v2126, 0.2
        %v2199 = vmul.f32 %v2128, 0.2
        %v2200 = vmul.f32 %v2132, 0.2
        %v2201 = vmul.f32 %v2134, 0.2
        %v2202 = vmul.f32 %v2136, 0.2
        %v2203 = vmul.f32 %v2138, 0.2
        %v2204 = vmax.f32 %v1982, %v2140
        %v2205 = vmax.f32 %v1984, %v2141
        %v2206 = vmax.f32 %v1986, %v2142
        %v2207 = vmax.f32 %v1988, %v2143
        %v2208 = vmax.f32 %v1992, %v2144
        %v2209 = vmax.f32 %v1994, %v2145
        %v2210 = vmax.f32 %v1996, %v2146
        %v2211 = vmax.f32 %v1998, %v2147
        %v2212 = vmax.f32 %v2002, %v2148
        %v2213 = vmax.f32 %v2004, %v2149
        %v2214 = vmax.f32 %v2006, %v2150
        %v2215 = vmax.f32 %v2008, %v2151
        %v2216 = vmax.f32 %v2012, %v2152
        %v2217 = vmax.f32 %v2014, %v2153
        %v2218 = vmax.f32 %v2016, %v2154
        %v2219 = vmax.f32 %v2018, %v2155
        %v2220 = vmax.f32 %v2022, %v2156
        %v2221 = vmax.f32 %v2024, %v2157
        %v2222 = vmax.f32 %v2026, %v2158
        %v2223 = vmax.f32 %v2028, %v2159
        %v2224 = vmax.f32 %v2032, %v2160
        %v2225 = vmax.f32 %v2034, %v2161
        %v2226 = vmax.f32 %v2036, %v2162
        %v2227 = vmax.f32 %v2038, %v2163
        %v2228 = vmax.f32 %v2042, %v2164
        %v2229 = vmax.f32 %v2044, %v2165
        %v2230 = vmax.f32 %v2046, %v2166
        %v2231 = vmax.f32 %v2048, %v2167
        %v2232 = vmax.f32 %v2052, %v2168
        %v2233 = vmax.f32 %v2054, %v2169
        %v2234 = vmax.f32 %v2056, %v2170
        %v2235 = vmax.f32 %v2058, %v2171
        %v2236 = vmax.f32 %v2062, %v2172
        %v2237 = vmax.f32 %v2064, %v2173
        %v2238 = vmax.f32 %v2066, %v2174
        %v2239 = vmax.f32 %v2068, %v2175
        %v2240 = vmax.f32 %v2072, %v2176
        %v2241 = vmax.f32 %v2074, %v2177
        %v2242 = vmax.f32 %v2076, %v2178
        %v2243 = vmax.f32 %v2078, %v2179
        %v2244 = vmax.f32 %v2082, %v2180
        %v2245 = vmax.f32 %v2084, %v2181
        %v2246 = vmax.f32 %v2086, %v2182
        %v2247 = vmax.f32 %v2088, %v2183
        %v2248 = vmax.f32 %v2092, %v2184
        %v2249 = vmax.f32 %v2094, %v2185
        %v2250 = vmax.f32 %v2096, %v2186
        %v2251 = vmax.f32 %v2098, %v2187
        %v2252 = vmax.f32 %v2102, %v2188
        %v2253 = vmax.f32 %v2104, %v2189
        %v2254 = vmax.f32 %v2106, %v2190
        %v2255 = vmax.f32 %v2108, %v2191
        %v2256 = vmax.f32 %v2112, %v2192
        %v2257 = vmax.f32 %v2114, %v2193
        %v2258 = vmax.f32 %v2116, %v2194
        %v2259 = vmax.f32 %v2118, %v2195
        %v2260 = vmax.f32 %v2122, %v2196
        %v2261 = vmax.f32 %v2124, %v2197
        %v2262 = vmax.f32 %v2126, %v2198
        %v2263 = vmax.f32 %v2128, %v2199
        %v2264 = vmax.f32 %v2132, %v2200
        %v2265 = vmax.f32 %v2134, %v2201
        %v2266 = vmax.f32 %v2136, %v2202
        %v2267 = vmax.f32 %v2138, %v2203
        %v2268 = vld [vmem:[%s6] sm:$0xf]
        %v2269 = vld [vmem:[%s6 + $0x4] sm:$0xf]
        %v2270 = vld [vmem:[%s6 + $0x8] sm:$0xf]
        %v2271 = vld [vmem:[%s6 + $0xc] sm:$0xf]
        %v2272 = vld [vmem:[%s6 + $0x10] sm:$0xf]
        %v2273 = vld [vmem:[%s6 + $0x14] sm:$0xf]
        %v2274 = vld [vmem:[%s6 + $0x18] sm:$0xf]
        %v2275 = vld [vmem:[%s6 + $0x1c] sm:$0xf]
        %v2276 = vld [vmem:[%s6 + $0x20] sm:$0xf]
        %v2277 = vld [vmem:[%s6 + $0x24] sm:$0xf]
        %v2278 = vld [vmem:[%s6 + $0x28] sm:$0xf]
        %v2279 = vld [vmem:[%s6 + $0x2c] sm:$0xf]
        %v2280 = vld [vmem:[%s6 + $0x30] sm:$0xf]
        %v2281 = vld [vmem:[%s6 + $0x34] sm:$0xf]
        %v2282 = vld [vmem:[%s6 + $0x38] sm:$0xf]
        %v2283 = vld [vmem:[%s6 + $0x3c] sm:$0xf]
        %v2284 = vld [vmem:[%s6 + $0x40] sm:$0xf]
        %v2285 = vld [vmem:[%s6 + $0x44] sm:$0xf]
        %v2286 = vld [vmem:[%s6 + $0x48] sm:$0xf]
        %v2287 = vld [vmem:[%s6 + $0x4c] sm:$0xf]
        %v2288 = vld [vmem:[%s6 + $0x50] sm:$0xf]
        %v2289 = vld [vmem:[%s6 + $0x54] sm:$0xf]
        %v2290 = vld [vmem:[%s6 + $0x58] sm:$0xf]
        %v2291 = vld [vmem:[%s6 + $0x5c] sm:$0xf]
        %v2292 = vld [vmem:[%s6 + $0x60] sm:$0xf]
        %v2293 = vld [vmem:[%s6 + $0x64] sm:$0xf]
        %v2294 = vld [vmem:[%s6 + $0x68] sm:$0xf]
        %v2295 = vld [vmem:[%s6 + $0x6c] sm:$0xf]
        %v2296 = vld [vmem:[%s6 + $0x70] sm:$0xf]
        %v2297 = vld [vmem:[%s6 + $0x74] sm:$0xf]
        %v2298 = vld [vmem:[%s6 + $0x78] sm:$0xf]
        %v2299 = vld [vmem:[%s6 + $0x7c] sm:$0xf]
        %v2300 = vpack.c.bf16 %v2206, %v2204
        %v2301 = vpack.c.bf16 %v2207, %v2205
        %v2302 = vpack.c.bf16 %v2210, %v2208
        %v2303 = vpack.c.bf16 %v2211, %v2209
        %v2304 = vpack.c.bf16 %v2214, %v2212
        %v2305 = vpack.c.bf16 %v2215, %v2213
        %v2306 = vpack.c.bf16 %v2218, %v2216
        %v2307 = vpack.c.bf16 %v2219, %v2217
        %v2308 = vpack.c.bf16 %v2222, %v2220
        %v2309 = vpack.c.bf16 %v2223, %v2221
        %v2310 = vpack.c.bf16 %v2226, %v2224
        %v2311 = vpack.c.bf16 %v2227, %v2225
        %v2312 = vpack.c.bf16 %v2230, %v2228
        %v2313 = vpack.c.bf16 %v2231, %v2229
        %v2314 = vpack.c.bf16 %v2234, %v2232
        %v2315 = vpack.c.bf16 %v2235, %v2233
        %v2316 = vpack.c.bf16 %v2238, %v2236
        %v2317 = vpack.c.bf16 %v2239, %v2237
        %v2318 = vpack.c.bf16 %v2242, %v2240
        %v2319 = vpack.c.bf16 %v2243, %v2241
        %v2320 = vpack.c.bf16 %v2246, %v2244
        %v2321 = vpack.c.bf16 %v2247, %v2245
        %v2322 = vpack.c.bf16 %v2250, %v2248
        %v2323 = vpack.c.bf16 %v2251, %v2249
        %v2324 = vpack.c.bf16 %v2254, %v2252
        %v2325 = vpack.c.bf16 %v2255, %v2253
        %v2326 = vpack.c.bf16 %v2258, %v2256
        %v2327 = vpack.c.bf16 %v2259, %v2257
        %v2328 = vpack.c.bf16 %v2262, %v2260
        %v2329 = vpack.c.bf16 %v2263, %v2261
        %v2330 = vpack.c.bf16 %v2266, %v2264
        %v2331 = vpack.c.bf16 %v2267, %v2265
        %v2364 = vunpack.c.l.b16 %v2268
        %v2365 = vunpack.c.l.b16 %v2269
        %v2366 = vunpack.c.l.b16 %v2270
        %v2367 = vunpack.c.l.b16 %v2271
        %v2368 = vunpack.c.l.b16 %v2272
        %v2369 = vunpack.c.l.b16 %v2273
        %v2370 = vunpack.c.l.b16 %v2274
        %v2371 = vunpack.c.l.b16 %v2275
        %v2372 = vunpack.c.l.b16 %v2276
        %v2373 = vunpack.c.l.b16 %v2277
        %v2374 = vunpack.c.l.b16 %v2278
        %v2375 = vunpack.c.l.b16 %v2279
        %v2376 = vunpack.c.l.b16 %v2280
        %v2377 = vunpack.c.l.b16 %v2281
        %v2378 = vunpack.c.l.b16 %v2282
        %v2379 = vunpack.c.l.b16 %v2283
        %v2380 = vunpack.c.l.b16 %v2284
        %v2381 = vunpack.c.l.b16 %v2285
        %v2382 = vunpack.c.l.b16 %v2286
        %v2383 = vunpack.c.l.b16 %v2287
        %v2384 = vunpack.c.l.b16 %v2288
        %v2385 = vunpack.c.l.b16 %v2289
        %v2386 = vunpack.c.l.b16 %v2290
        %v2387 = vunpack.c.l.b16 %v2291
        %v2388 = vunpack.c.l.b16 %v2292
        %v2389 = vunpack.c.l.b16 %v2293
        %v2390 = vunpack.c.l.b16 %v2294
        %v2391 = vunpack.c.l.b16 %v2295
        %v2392 = vunpack.c.l.b16 %v2296
        %v2393 = vunpack.c.l.b16 %v2297
        %v2394 = vunpack.c.l.b16 %v2298
        %v2395 = vunpack.c.l.b16 %v2299
        %v2396 = vpack.c.b16 %v2365, %v2364
        %v2397 = vpack.c.b16 %v2367, %v2366
        %v2398 = vpack.c.b16 %v2369, %v2368
        %v2399 = vpack.c.b16 %v2371, %v2370
        %v2400 = vpack.c.b16 %v2373, %v2372
        %v2401 = vpack.c.b16 %v2375, %v2374
        %v2402 = vpack.c.b16 %v2377, %v2376
        %v2403 = vpack.c.b16 %v2379, %v2378
        %v2404 = vpack.c.b16 %v2381, %v2380
        %v2405 = vpack.c.b16 %v2383, %v2382
        %v2406 = vpack.c.b16 %v2385, %v2384
        %v2407 = vpack.c.b16 %v2387, %v2386
        %v2408 = vpack.c.b16 %v2389, %v2388
        %v2409 = vpack.c.b16 %v2391, %v2390
        %v2410 = vpack.c.b16 %v2393, %v2392
        %v2411 = vpack.c.b16 %v2395, %v2394
        %2428 = vmatprep.subr.bf16.mxu0 0
        %2429 = vmatpush1.bf16.msra.mxu0 %v2396
        %2430 = vmatprep.subr.bf16.mxu0 0
        %2431 = vmatpush1.bf16.msra.mxu0 %v2397
        %2432 = vmatprep.subr.bf16.mxu0 0
        %2433 = vmatpush1.bf16.msra.mxu0 %v2398
        %2434 = vmatprep.subr.bf16.mxu0 0
        %2435 = vmatpush1.bf16.msra.mxu0 %v2399
        %2436 = vmatprep.subr.bf16.mxu0 0
        %2437 = vmatpush1.bf16.msra.mxu0 %v2400
        %2438 = vmatprep.subr.bf16.mxu0 0
        %2439 = vmatpush1.bf16.msra.mxu0 %v2401
        %2440 = vmatprep.subr.bf16.mxu0 0
        %2441 = vmatpush1.bf16.msra.mxu0 %v2402
        %2442 = vmatprep.subr.bf16.mxu0 0
        %2443 = vmatpush1.bf16.msra.mxu0 %v2403
        %2444 = vmatprep.subr.bf16.mxu0 0
        %2445 = vmatpush1.bf16.msra.mxu0 %v2404
        %2446 = vmatprep.subr.bf16.mxu0 0
        %2447 = vmatpush1.bf16.msra.mxu0 %v2405
        %2448 = vmatprep.subr.bf16.mxu0 0
        %2449 = vmatpush1.bf16.msra.mxu0 %v2406
        %2450 = vmatprep.subr.bf16.mxu0 0
        %2451 = vmatpush1.bf16.msra.mxu0 %v2407
        %2452 = vmatprep.subr.bf16.mxu0 0
        %2453 = vmatpush1.bf16.msra.mxu0 %v2408
        %2454 = vmatprep.subr.bf16.mxu0 0
        %2455 = vmatpush1.bf16.msra.mxu0 %v2409
        %2456 = vmatprep.subr.bf16.mxu0 0
        %2457 = vmatpush1.bf16.msra.mxu0 %v2410
        %2458 = vmatprep.subr.bf16.mxu0 0
        %2459 = vmatpush1.bf16.msra.mxu0 %v2411
        %2460 = vmatprep.mubr.bf16.mxu0 %v2301
        %2461 = vmatmul.mubr.bf16.gmra.mrb[0].mxu0 %v2300
        %v2462 = vpop.f32.mrb[0].mxu0
        %v2463 = vadd.f32 0.0, %v2462
        %v2464 = vpop.f32.mrb[0].mxu0
        %v2465 = vpop.f32.mrb[0].mxu0
        %v2466 = vadd.f32 0.0, %v2465
        %v2467 = vpop.f32.mrb[0].mxu0
        %2468 = vmatprep.mubr.bf16.mxu0 %v2303
        %2469 = vmatmul.mubr.bf16.gmra.mrb[0].mxu0 %v2302
        %v2470 = vpop.f32.mrb[0].mxu0
        %v2471 = vadd.f32 0.0, %v2470
        %v2472 = vpop.f32.mrb[0].mxu0
        %v2473 = vpop.f32.mrb[0].mxu0
        %v2474 = vadd.f32 0.0, %v2473
        %v2475 = vpop.f32.mrb[0].mxu0
        %2476 = vmatprep.mubr.bf16.mxu0 %v2305
        %2477 = vmatmul.mubr.bf16.gmra.mrb[0].mxu0 %v2304
        %v2478 = vpop.f32.mrb[0].mxu0
        %v2479 = vadd.f32 0.0, %v2478
        %v2480 = vpop.f32.mrb[0].mxu0
        %v2481 = vpop.f32.mrb[0].mxu0
        %v2482 = vadd.f32 0.0, %v2481
        %v2483 = vpop.f32.mrb[0].mxu0
        %2484 = vmatprep.mubr.bf16.mxu0 %v2307
        %2485 = vmatmul.mubr.bf16.gmra.mrb[0].mxu0 %v2306
        %v2486 = vpop.f32.mrb[0].mxu0
        %v2487 = vadd.f32 0.0, %v2486
        %v2488 = vpop.f32.mrb[0].mxu0
        %v2489 = vpop.f32.mrb[0].mxu0
        %v2490 = vadd.f32 0.0, %v2489
        %v2491 = vpop.f32.mrb[0].mxu0
        %2492 = vmatprep.mubr.bf16.mxu0 %v2309
        %2493 = vmatmul.mubr.bf16.gmra.mrb[0].mxu0 %v2308
        %v2494 = vpop.f32.mrb[0].mxu0
        %v2495 = vadd.f32 0.0, %v2494
        %v2496 = vpop.f32.mrb[0].mxu0
        %v2497 = vpop.f32.mrb[0].mxu0
        %v2498 = vadd.f32 0.0, %v2497
        %v2499 = vpop.f32.mrb[0].mxu0
        %2500 = vmatprep.mubr.bf16.mxu0 %v2311
        %2501 = vmatmul.mubr.bf16.gmra.mrb[0].mxu0 %v2310
        %v2502 = vpop.f32.mrb[0].mxu0
        %v2503 = vadd.f32 0.0, %v2502
        %v2504 = vpop.f32.mrb[0].mxu0
        %v2505 = vpop.f32.mrb[0].mxu0
        %v2506 = vadd.f32 0.0, %v2505
        %v2507 = vpop.f32.mrb[0].mxu0
        %2508 = vmatprep.mubr.bf16.mxu0 %v2313
        %2509 = vmatmul.mubr.bf16.gmra.mrb[0].mxu0 %v2312
        %v2510 = vpop.f32.mrb[0].mxu0
        %v2511 = vadd.f32 0.0, %v2510
        %v2512 = vpop.f32.mrb[0].mxu0
        %v2513 = vpop.f32.mrb[0].mxu0
        %v2514 = vadd.f32 0.0, %v2513
        %v2515 = vpop.f32.mrb[0].mxu0
        %2516 = vmatprep.mubr.bf16.mxu0 %v2315
        %2517 = vmatmul.mubr.bf16.gmra.mrb[0].mxu0 %v2314
        %v2518 = vpop.f32.mrb[0].mxu0
        %v2519 = vadd.f32 0.0, %v2518
        %v2520 = vpop.f32.mrb[0].mxu0
        %v2521 = vpop.f32.mrb[0].mxu0
        %v2522 = vadd.f32 0.0, %v2521
        %v2523 = vpop.f32.mrb[0].mxu0
        %2524 = vmatprep.mubr.bf16.mxu0 %v2317
        %2525 = vmatmul.mubr.bf16.gmra.mrb[0].mxu0 %v2316
        %v2526 = vpop.f32.mrb[0].mxu0
        %v2527 = vadd.f32 0.0, %v2526
        %v2528 = vpop.f32.mrb[0].mxu0
        %v2529 = vpop.f32.mrb[0].mxu0
        %v2530 = vadd.f32 0.0, %v2529
        %v2531 = vpop.f32.mrb[0].mxu0
        %2532 = vmatprep.mubr.bf16.mxu0 %v2319
        %2533 = vmatmul.mubr.bf16.gmra.mrb[0].mxu0 %v2318
        %v2534 = vpop.f32.mrb[0].mxu0
        %v2535 = vadd.f32 0.0, %v2534
        %v2536 = vpop.f32.mrb[0].mxu0
        %v2537 = vpop.f32.mrb[0].mxu0
        %v2538 = vadd.f32 0.0, %v2537
        %v2539 = vpop.f32.mrb[0].mxu0
        %2540 = vmatprep.mubr.bf16.mxu0 %v2321
        %2541 = vmatmul.mubr.bf16.gmra.mrb[0].mxu0 %v2320
        %v2542 = vpop.f32.mrb[0].mxu0
        %v2543 = vadd.f32 0.0, %v2542
        %v2544 = vpop.f32.mrb[0].mxu0
        %v2545 = vpop.f32.mrb[0].mxu0
        %v2546 = vadd.f32 0.0, %v2545
        %v2547 = vpop.f32.mrb[0].mxu0
        %2548 = vmatprep.mubr.bf16.mxu0 %v2323
        %2549 = vmatmul.mubr.bf16.gmra.mrb[0].mxu0 %v2322
        %v2550 = vpop.f32.mrb[0].mxu0
        %v2551 = vadd.f32 0.0, %v2550
        %v2552 = vpop.f32.mrb[0].mxu0
        %v2553 = vpop.f32.mrb[0].mxu0
        %v2554 = vadd.f32 0.0, %v2553
        %v2555 = vpop.f32.mrb[0].mxu0
        %2556 = vmatprep.mubr.bf16.mxu0 %v2325
        %2557 = vmatmul.mubr.bf16.gmra.mrb[0].mxu0 %v2324
        %v2558 = vpop.f32.mrb[0].mxu0
        %v2559 = vadd.f32 0.0, %v2558
        %v2560 = vpop.f32.mrb[0].mxu0
        %v2561 = vpop.f32.mrb[0].mxu0
        %v2562 = vadd.f32 0.0, %v2561
        %v2563 = vpop.f32.mrb[0].mxu0
        %2564 = vmatprep.mubr.bf16.mxu0 %v2327
        %2565 = vmatmul.mubr.bf16.gmra.mrb[0].mxu0 %v2326
        %v2566 = vpop.f32.mrb[0].mxu0
        %v2567 = vadd.f32 0.0, %v2566
        %v2568 = vpop.f32.mrb[0].mxu0
        %v2569 = vpop.f32.mrb[0].mxu0
        %v2570 = vadd.f32 0.0, %v2569
        %v2571 = vpop.f32.mrb[0].mxu0
        %2572 = vmatprep.mubr.bf16.mxu0 %v2329
        %2573 = vmatmul.mubr.bf16.gmra.mrb[0].mxu0 %v2328
        %v2574 = vpop.f32.mrb[0].mxu0
        %v2575 = vadd.f32 0.0, %v2574
        %v2576 = vpop.f32.mrb[0].mxu0
        %v2577 = vpop.f32.mrb[0].mxu0
        %v2578 = vadd.f32 0.0, %v2577
        %v2579 = vpop.f32.mrb[0].mxu0
        %2580 = vmatprep.mubr.bf16.mxu0 %v2331
        %2581 = vmatmul.mubr.bf16.gmra.mrb[0].mxu0 %v2330
        %v2582 = vpop.f32.mrb[0].mxu0
        %v2583 = vadd.f32 0.0, %v2582
        %v2584 = vpop.f32.mrb[0].mxu0
        %v2585 = vpop.f32.mrb[0].mxu0
        %v2586 = vadd.f32 0.0, %v2585
        %v2587 = vpop.f32.mrb[0].mxu0
        %2588 = vdwg.mxu0
        %2589 = vst [vmem:[%s316] sm:$0xff] %v2463
        %2590 = vst [vmem:[%s316 + $0x8] sm:$0xff] %v2466
        %2591 = vst [vmem:[%s316 + $0x10] sm:$0xff] %v2471
        %2592 = vst [vmem:[%s316 + $0x18] sm:$0xff] %v2474
        %2593 = vst [vmem:[%s316 + $0x20] sm:$0xff] %v2479
        %2594 = vst [vmem:[%s316 + $0x28] sm:$0xff] %v2482
        %2595 = vst [vmem:[%s316 + $0x30] sm:$0xff] %v2487
        %2596 = vst [vmem:[%s316 + $0x38] sm:$0xff] %v2490
        %2597 = vst [vmem:[%s316 + $0x40] sm:$0xff] %v2495
        %2598 = vst [vmem:[%s316 + $0x48] sm:$0xff] %v2498
        %2599 = vst [vmem:[%s316 + $0x50] sm:$0xff] %v2503
        %2600 = vst [vmem:[%s316 + $0x58] sm:$0xff] %v2506
        %2601 = vst [vmem:[%s316 + $0x60] sm:$0xff] %v2511
        %2602 = vst [vmem:[%s316 + $0x68] sm:$0xff] %v2514
        %2603 = vst [vmem:[%s316 + $0x70] sm:$0xff] %v2519
        %2604 = vst [vmem:[%s316 + $0x78] sm:$0xff] %v2522
        %2605 = vst [vmem:[%s316 + $0x80] sm:$0xff] %v2527
        %2606 = vst [vmem:[%s316 + $0x88] sm:$0xff] %v2530
        %2607 = vst [vmem:[%s316 + $0x90] sm:$0xff] %v2535
        %2608 = vst [vmem:[%s316 + $0x98] sm:$0xff] %v2538
        %2609 = vst [vmem:[%s316 + $0xa0] sm:$0xff] %v2543
        %2610 = vst [vmem:[%s316 + $0xa8] sm:$0xff] %v2546
        %2611 = vst [vmem:[%s316 + $0xb0] sm:$0xff] %v2551
        %2612 = vst [vmem:[%s316 + $0xb8] sm:$0xff] %v2554
        %2613 = vst [vmem:[%s316 + $0xc0] sm:$0xff] %v2559
        %2614 = vst [vmem:[%s316 + $0xc8] sm:$0xff] %v2562
        %2615 = vst [vmem:[%s316 + $0xd0] sm:$0xff] %v2567
        %2616 = vst [vmem:[%s316 + $0xd8] sm:$0xff] %v2570
        %2617 = vst [vmem:[%s316 + $0xe0] sm:$0xff] %v2575
        %2618 = vst [vmem:[%s316 + $0xe8] sm:$0xff] %v2578
        %2619 = vst [vmem:[%s316 + $0xf0] sm:$0xff] %v2583
        %2620 = vst [vmem:[%s316 + $0xf8] sm:$0xff] %v2586
        %s2621 = sand.u32 %s183, 1
        %s2622 = scalar_lea.sflag [#allocation4], %s2621
        %s2623 = sand.u32 %s183, 1
        %s2624 = smul.addr %s2623, 256
        %s2625 = scalar_lea.vmem [#allocation8], %s2624
        // Predicated region
        $region61: #{decoder_forward.1} parent=47 // pred_check
          %p2626 = pneg %p193
        $region62: #{decoder_forward.1} parent=47 // pred_check_branch
          %2628 = sbr.rel (%p2626) target = $region64
        $region63: #{decoder_forward.1} parent=47 // pred_region
          %s2629 = smul.u32 32, %s23
          %s2631 = ssub.s32 4096, 4096
          %2632 = vsyncadd %s2622, %s2631
          %s2633 = smul.addr %s2629, 128
          %s2634 = scalar_lea.hbm %s7, %s2633
          %s2635 = sshll.u32 %s2625, 4
          %s2636 = int_to_ptr.vmem [resolvable:$true] %s2635
          %2641 = dma.vmem_to_hbm [thread:$0]  %s2636, 4096, %s2634, %s2622, 128, 128, 8
        $region64: #{decoder_forward.1} parent=47 // pred_fallthru
          _
      $region48: #{decoder_forward.1} parent=5 // pred_fallthru
        _
      %p2642 = scmp.le.s32.totalorder 2, %s18
      // Predicated region
      $region65: #{decoder_forward.1} parent=5 // pred_check
        %p2643 = pneg %p2642
      $region66: #{decoder_forward.1} parent=5 // pred_check_branch
        %2645 = sbr.rel (%p2643) target = $region68
      $region67: #{decoder_forward.1} parent=5 // pred_region
        %s2646 = ssub.s32 %s18, 2
        // Predicated region
        $region69: #{decoder_forward.1} parent=67 // pred_check
          %p2647 = pneg %p199
        $region70: #{decoder_forward.1} parent=67 // pred_check_branch
          %2649 = sbr.rel (%p2647) target = $region72
        $region71: #{decoder_forward.1} parent=67 // pred_region
          %s2650 = sand.u32 %s184, 1
          %s2651 = scalar_lea.sflag [#allocation4], %s2650
          %s2652 = sand.u32 %s184, 1
          %s2653 = smul.addr %s2652, 256
          %s2654 = scalar_lea.vmem [#allocation8], %s2653
          %2655 = dma.done %s2651, 4096
        $region72: #{decoder_forward.1} parent=67 // pred_fallthru
          _
      $region68: #{decoder_forward.1} parent=5 // pred_fallthru
        _
    $region6: #{decoder_forward.1} parent=1 // loop_footer
      %s22 = sadd.s32 1, %s18
    $region7: #{decoder_forward.1} parent=1 // loop_footer_branch
      %17 = sbr.rel target = $region3
    $region8: #{decoder_forward.1} parent=1 // loop_exit
      _
    %2656 = vsyncpa [#allocation3], 1
    %s2657 = scalar_lea.sflag [#allocation3], 1
    %2658 = vsyncpa %s2657, 1
    %2659 = vsyncpa [#allocation6], 1
    %2660 = vsyncpa [#allocation4], 1
    %s2661 = scalar_lea.sflag [#allocation4], 1
    %2662 = vsyncpa %s2661, 1

</llo_original>
